<compile_context>
chip_gen: v7x
topology: tpu7x:2x2x1
jax: 0.10.0
libtpu: 0.0.40
codegen_flags: <defaults>
</compile_context>

<pallas_src>
import functools
import math

import jax
import jax.numpy as jnp
from jax.experimental import pallas as pl
from jax.experimental.pallas import tpu as pltpu

LN_EPS = 1e-5  # nn.LayerNorm default eps
INV_SQRT2 = 1.0 / math.sqrt(2.0)


def _round_up(x, m):
    return ((x + m - 1) // m) * m


# ---------------------------------------------------------------------------
# Host-side hardware / capability probing.
# ---------------------------------------------------------------------------

def _tpu_generation():
    """Best-effort TPU generation (4/5/6/7) from device_kind; None if unknown."""
    try:
        kind = jax.devices()[0].device_kind.lower()
    except Exception:
        return None
    for gen in (7, 6, 5, 4):
        if f"v{gen}" in kind or f"tpu{gen}" in kind:
            return gen
    return None


@functools.lru_cache(maxsize=None)
def _feature_ok(feature):
    """Compile + run a tiny probe kernel once to verify an optional feature on
    this JAX build / backend.  The *real* kernel never runs under try/except,
    so genuine lowering or VMEM errors are not masked."""
    try:
        if feature == "buffered_weights":
            if not hasattr(pl, "Buffered"):
                return False
            spec = pl.BlockSpec((8, 128), lambda i: (0, 0),
                                pipeline_mode=pl.Buffered(1))
            dt = jnp.float32

            def k(x_ref, o_ref):
                o_ref[...] = x_ref[...]
        elif isinstance(feature, tuple) and feature[0] == "erf":
            spec = pl.BlockSpec((8, 128), lambda i: (0, 0))
            dt = jnp.dtype(feature[1])

            def k(x_ref, o_ref):
                o_ref[...] = jax.lax.erf(x_ref[...])
        else:
            return False

        out = pl.pallas_call(
            k,
            out_shape=jax.ShapeDtypeStruct((8, 128), dt),
            grid=(1,),
            in_specs=[spec],
            out_specs=pl.BlockSpec((8, 128), lambda i: (0, 0)),
        )(jnp.zeros((8, 128), dt))
        jax.block_until_ready(out)
        return True
    except Exception:  # probe only
        return False


def _resolve_precision(epilogue_dtype=None, approx_gelu=None):
    """Generation-gated epilogue dtype + GELU mode (shared with the reference)."""
    gen = _tpu_generation()
    if epilogue_dtype is None:
        # bf16 VPU exists on v6e/v7x (epilogue is the binding VALU slot at
        # production channel counts); v5e / unknown stays f32.
        epilogue_dtype = jnp.bfloat16 if gen in (6, 7) else jnp.float32
    if approx_gelu is None:
        # Exact erf-GELU (module semantics) when it lowers on this build /
        # dtype; otherwise tanh-approx GELU on the EUP (~1e-3 deviation).
        approx_gelu = not _feature_ok(("erf", jnp.dtype(epilogue_dtype).name))
    return jnp.dtype(epilogue_dtype), bool(approx_gelu)


# ---------------------------------------------------------------------------
# Kernel.
# ---------------------------------------------------------------------------

def mlp_head_kernel(x_ref,
                    w1_ref, b1_ref, g1_ref, be1_ref,
                    w2_ref, b2_ref, g2_ref, be2_ref,
                    w3t_ref, b3t_ref,
                    o_ref, *, epilogue_dtype, approx_gelu):
    """Fused MLP head for one (tn, C) token tile.

    * matmul operands bf16 (MXU-native), f32 accumulation
    * LN statistics in f32; scale/shift + GELU in `epilogue_dtype`
    * final projection is an NT matmul (contract both operands on their last
      dim), so the class-major (nc_pad, tn) NCHW output tile needs no
      explicit transpose.
    """

    def ln_act(h_f32, g_ref, be_ref):
        mean = jnp.mean(h_f32, axis=-1, keepdims=True)
        var = jnp.mean(jnp.square(h_f32 - mean), axis=-1, keepdims=True)
        xn = ((h_f32 - mean) * jax.lax.rsqrt(var + LN_EPS)).astype(epilogue_dtype)
        y = xn * g_ref[...].astype(epilogue_dtype) + be_ref[...].astype(epilogue_dtype)
        if approx_gelu:
            return jax.nn.gelu(y, approximate=True)      # tanh -> EUP slot
        return 0.5 * y * (1.0 + jax.lax.erf(y * INV_SQRT2))  # exact (module default)

    # In-kernel bf16 cast of the tokens: free VPU filler, avoids a wrapper
    # cast pass over HBM.
    x = x_ref[...].astype(jnp.bfloat16)

    h = jnp.dot(x, w1_ref[...], preferred_element_type=jnp.float32) + b1_ref[...]
    h = ln_act(h, g1_ref, be1_ref)

    h = jnp.dot(h.astype(jnp.bfloat16), w2_ref[...],
                preferred_element_type=jnp.float32) + b2_ref[...]
    h = ln_act(h, g2_ref, be2_ref)

    # (nc_pad, O) x (tn, O) contracted on O -> (nc_pad, tn).
    out_t = jax.lax.dot_general(
        w3t_ref[...], h.astype(jnp.bfloat16),
        dimension_numbers=(((1,), (1,)), ((), ())),
        preferred_element_type=jnp.float32) + b3t_ref[...]
    o_ref[...] = out_t.astype(o_ref.dtype)


# ---------------------------------------------------------------------------
# Tiling / VMEM budgeting.
# ---------------------------------------------------------------------------

def _choose_tn(N, B, gen):
    """Patch-axis tile: largest lane-friendly tile within the per-generation
    scoped-VMEM comfort zone.  Only v7x (2 TensorCores) trades tile size for
    >= 2 total grid steps so the "parallel" axes can shard across cores."""
    tn_max = 512 if gen == 6 else 256          # v5e: 16 MiB scoped; v7x: 64 MiB phys
    if N <= 128:
        tn = N                                  # block == full dim: always legal
    elif N <= tn_max:
        tn = _round_up(N, 128)                  # one lane-dense tile per image
    else:
        tn = tn_max
    if gen == 7 and B * pl.cdiv(N, tn) < 2 and tn >= 256:
        tn = _round_up(tn // 2, 128)            # give the second TensorCore work
    return tn


def _vmem_limit_bytes(tn, C, E, O, nc_pad, x_itemsize, weight_buffers, gen):
    weights = (C * E + E * O + nc_pad * O) * 2 * weight_buffers    # bf16 weights
    small = (3 * E + 3 * O + nc_pad) * 4 * weight_buffers           # f32 bias/LN
    tokens = 2 * tn * C * x_itemsize                                # in, 2 bufs
    outs = 2 * nc_pad * tn * 4                                      # out, 2 bufs
    interm = 4 * tn * max(E, O) * 4                                 # fused temporaries
    need = weights + small + tokens + outs + interm
    cap = (60 << 20) if gen == 7 else (100 << 20)                   # v7x: 64 MiB/TC
    return int(min(cap, max(32 << 20, int(need * 1.5))))


# ---------------------------------------------------------------------------
# Wrapper.
# ---------------------------------------------------------------------------

def simple_mlp_head_forward(features, params, num_classes, *, tn=None,
                            epilogue_dtype=None, approx_gelu=None,
                            drop_first_token=True):
    """features: (B, N_tokens, in_channels) -> (B, num_classes, Hp, Wp)."""
    (w1, b1, g1, be1, w2, b2, g2, be2, w3, b3) = params

    # Mirrors the PyTorch module: drop the leading (CLS) token when present.
    if drop_first_token and features.shape[1] > 0:
        x = features[:, 1:, :]
    else:
        x = features

    B, N, C = x.shape
    hp = wp = int(N ** 0.5)
    if hp * wp != N:
        raise ValueError("Cannot infer square patch grid from num_patches.")

    E = w1.shape[1]
    O = w2.shape[1]

    gen = _tpu_generation()
    epilogue_dtype, approx_gelu = _resolve_precision(epilogue_dtype, approx_gelu)

    tn = _choose_tn(N, B, gen) if tn is None else max(8, _round_up(tn, 8))
    N_pad = _round_up(N, tn)
    if N_pad != N:
        # Zero rows only when needed.  Padded rows see LayerNorm with var=0 ->
        # rsqrt(LN_EPS) (finite, ~316); they are sliced off below, so keep
        # LN_EPS > 0 if this padding path is ever touched.
        x = jnp.pad(x, ((0, 0), (0, N_pad - N), (0, 0)))

    # Class-major (NCHW) output: classes only need a sublane multiple (8);
    # the lane axis of the stored block is tn (multiple of 128 at real sizes).
    nc_pad = max(8, _round_up(num_classes, 8))
    w3t = jnp.pad(w3, ((0, 0), (0, nc_pad - num_classes))).T            # (nc_pad, O)
    b3t = jnp.pad(b3, ((0, 0), (0, nc_pad - num_classes))).reshape(nc_pad, 1)

    # Weights are small & constant: cast once host-side.  Tokens stay in their
    # original dtype and are cast on-chip.
    args = (w1.astype(jnp.bfloat16), b1, g1, be1,
            w2.astype(jnp.bfloat16), b2, g2, be2,
            w3t.astype(jnp.bfloat16), b3t)

    buffered = _feature_ok("buffered_weights")
    const2 = lambda b, i: (0, 0)

    def wspec(shape):
        if buffered:
            # Constant index_map: fetched once, one VMEM buffer suffices.
            return pl.BlockSpec(shape, const2, pipeline_mode=pl.Buffered(1))
        return pl.BlockSpec(shape, const2)

    in_specs = [
        # Per-step varying token tile.  Bump to pl.Buffered(3) here if
        # profiling shows exposed DMA at small C.
        pl.BlockSpec((None, tn, C), lambda b, i: (b, i, 0)),
        wspec((C, E)), wspec((1, E)), wspec((1, E)), wspec((1, E)),   # proj_1 / ln_1
        wspec((E, O)), wspec((1, O)), wspec((1, O)), wspec((1, O)),   # proj_2 / ln_2
        wspec((nc_pad, O)), wspec((nc_pad, 1)),                       # proj_final (T)
    ]
    out_specs = pl.BlockSpec((None, nc_pad, tn), lambda b, i: (b, 0, i))

    kernel = functools.partial(mlp_head_kernel,
                               epilogue_dtype=epilogue_dtype,
                               approx_gelu=approx_gelu)

    out = pl.pallas_call(
        kernel,
        out_shape=jax.ShapeDtypeStruct((B, nc_pad, N_pad), jnp.float32),
        grid_spec=pltpu.PrefetchScalarGridSpec(
            num_scalar_prefetch=0,
            grid=(B, N_pad // tn),
            in_specs=in_specs,
            out_specs=out_specs,
        ),
        compiler_params=pltpu.CompilerParams(
            dimension_semantics=("parallel", "parallel"),
            vmem_limit_bytes=_vmem_limit_bytes(
                tn, C, E, O, nc_pad, x.dtype.itemsize,
                1 if buffered else 2, gen),
        ),
    )(x, *args)

    # Kernel already emitted class-major (B, nc_pad, N_pad): slice + reshape
    # only (no wrapper transpose / HBM permute pass).
    return out[:, :num_classes, :N].reshape(B, num_classes, hp, wp)


# ---------------------------------------------------------------------------
# Pure-JAX reference & demo.
# ---------------------------------------------------------------------------

def _reference_forward(features, params, num_classes, *,
                       matmul_dtype=jnp.float32, epilogue_dtype=jnp.float32,
                       approx_gelu=False, drop_first_token=True):
    """With the f32 defaults this is the PyTorch module's math; with
    matmul_dtype=bf16 and matching epilogue it mirrors the kernel's precision."""
    (w1, b1, g1, be1, w2, b2, g2, be2, w3, b3) = params
    x = features[:, 1:, :] if (drop_first_token and features.shape[1] > 0) else features

    def dot(a, b):
        return jnp.dot(a.astype(matmul_dtype), b.astype(matmul_dtype),
                       preferred_element_type=jnp.float32)

    def ln_act(h, g, be):
        m = jnp.mean(h, axis=-1, keepdims=True)
        v = jnp.mean(jnp.square(h - m), axis=-1, keepdims=True)
        xn = ((h - m) * jax.lax.rsqrt(v + LN_EPS)).astype(epilogue_dtype)
        y = xn * g.astype(epilogue_dtype) + be.astype(epilogue_dtype)
        if approx_gelu:
            return jax.nn.gelu(y, approximate=True)
        return 0.5 * y * (1.0 + jax.lax.erf(y * INV_SQRT2))

    h = ln_act(dot(x, w1) + b1, g1, be1)
    h = ln_act(dot(h, w2) + b2, g2, be2)
    h = (dot(h, w3) + b3).astype(jnp.float32)
    B, N, _ = h.shape
    hp = wp = int(N ** 0.5)
    return jnp.transpose(h, (0, 2, 1)).reshape(B, num_classes, hp, wp)


def init_params(key, in_channels, embed_dim, output_embed_dim, num_classes):
    ks = jax.random.split(key, 6)
    scale = 0.02
    w1 = scale * jax.random.normal(ks[0], (in_channels, embed_dim), jnp.float32)
    b1 = scale * jax.random.normal(ks[1], (1, embed_dim), jnp.float32)
    g1 = jnp.ones((1, embed_dim), jnp.float32)            # LayerNorm default init
    be1 = jnp.zeros((1, embed_dim), jnp.float32)
    w2 = scale * jax.random.normal(ks[2], (embed_dim, output_embed_dim), jnp.float32)
    b2 = scale * jax.random.normal(ks[3], (1, output_embed_dim), jnp.float32)
    g2 = jnp.ones((1, output_embed_dim), jnp.float32)
    be2 = jnp.zeros((1, output_embed_dim), jnp.float32)
    w3 = scale * jax.random.normal(ks[4], (output_embed_dim, num_classes), jnp.float32)
    b3 = scale * jax.random.normal(ks[5], (1, num_classes), jnp.float32)
    return (w1, b1, g1, be1, w2, b2, g2, be2, w3, b3)


if __name__ == "__main__":
    # Small shapes consistent with the module: B=2, 8x8=64 patches (+1 CLS
    # token), in_channels=32, embed_dim=128, output_embed_dim=128, classes=16.
    B, HP, WP = 2, 8, 8
    IN_CH, EMBED, OUT_EMBED, NUM_CLASSES = 32, 128, 128, 16
    N_TOKENS = HP * WP + 1  # includes CLS token, dropped inside forward

    key = jax.random.PRNGKey(0)
    k_feat, k_params = jax.random.split(key)
    features = jax.random.normal(k_feat, (B, N_TOKENS, IN_CH), jnp.float32)
    params = init_params(k_params, IN_CH, EMBED, OUT_EMBED, NUM_CLASSES)

    # Resolve the generation-dependent precision once so the tight reference
    # check uses exactly the same mixed precision as the kernel.
    epi_dtype, use_approx = _resolve_precision()

    out = jax.block_until_ready(
        simple_mlp_head_forward(features, params, NUM_CLASSES,
                                epilogue_dtype=epi_dtype,
                                approx_gelu=use_approx))
    assert out.shape == (B, NUM_CLASSES, HP, WP), out.shape

    # Tight check against a reference with matching mixed precision.
    ref_mixed = jax.block_until_ready(_reference_forward(
        features, params, NUM_CLASSES, matmul_dtype=jnp.bfloat16,
        epilogue_dtype=epi_dtype, approx_gelu=use_approx))
    assert jnp.allclose(out, ref_mixed, rtol=2e-2, atol=1e-2), \
        "mismatch vs mixed-precision JAX reference"

    # Looser check against full-f32 module semantics (bf16 operand rounding).
    ref_f32 = jax.block_until_ready(
        _reference_forward(features, params, NUM_CLASSES))
    assert jnp.allclose(out, ref_f32, rtol=5e-2, atol=5e-2), \
        "mismatch vs f32 JAX reference"

    print("KERNEL_OK")
</pallas_src>

<mosaic_0001>
module attributes {stable_mosaic.version = 11 : i64} {
  func.func @k(%arg0: i32, %arg1: memref<8x128xf32, #tpu.memory_space<vmem>>, %arg2: memref<8x128xf32, #tpu.memory_space<vmem>>) attributes {dimension_semantics = [#tpu.dimension_semantics<arbitrary>], iteration_bounds = array<i64: 1>, scalar_prefetch = 0 : i64, scratch_operands = 0 : i64, tpu.core_type = #tpu.core_type<tc>, window_params = [{pipeline_mode = #tpu.pipeline_mode<synchronous>, transform_indices = @transform_0, window_bounds = array<i64: 8, 128>}, {pipeline_mode = #tpu.pipeline_mode<synchronous>, transform_indices = @transform_1, window_bounds = array<i64: 8, 128>}]} {
    %c0 = arith.constant 0 : index
    %c0_0 = arith.constant 0 : index
    %0 = vector.load %arg1[%c0, %c0_0] : memref<8x128xf32, #tpu.memory_space<vmem>>, vector<8x128xf32>
    %1 = math.erf %0 : vector<8x128xf32>
    %c0_1 = arith.constant 0 : index
    %c0_2 = arith.constant 0 : index
    %2 = vector.load %arg2[%c0_1, %c0_2] : memref<8x128xf32, #tpu.memory_space<vmem>>, vector<8x128xf32>
    tpu.vector_store %arg2[%c0_1, %c0_2], %1 {strides = array<i32>} : memref<8x128xf32, #tpu.memory_space<vmem>>, vector<8x128xf32>,
    return
  }
  func.func @transform_0(%arg0: i32) -> (i32, i32) {
    %c0_i32 = arith.constant 0 : i32
    %c0_i32_0 = arith.constant 0 : i32
    %c0_i32_1 = arith.constant 0 : i32
    return %c0_i32, %c0_i32_0 : i32, i32
  }
  func.func @transform_1(%arg0: i32) -> (i32, i32) {
    %c0_i32 = arith.constant 0 : i32
    %c0_i32_0 = arith.constant 0 : i32
    %c0_i32_1 = arith.constant 0 : i32
    return %c0_i32, %c0_i32_0 : i32, i32
  }
}

module attributes {stable_mosaic.version = 11 : i64} {
  func.func @k(%arg0: i32, %arg1: memref<8x128xf32, #tpu.memory_space<vmem>>, %arg2: memref<8x128xf32, #tpu.memory_space<vmem>>) attributes {dimension_semantics = [#tpu.dimension_semantics<arbitrary>], iteration_bounds = array<i64: 1>, scalar_prefetch = 0 : i64, scratch_operands = 0 : i64, tpu.core_type = #tpu.core_type<tc>, window_params = [{pipeline_mode = #tpu.pipeline_mode<synchronous>, transform_indices = @transform_0, window_bounds = array<i64: 8, 128>}, {pipeline_mode = #tpu.pipeline_mode<synchronous>, transform_indices = @transform_1, window_bounds = array<i64: 8, 128>}]} {
    %c0 = arith.constant 0 : index
    %c0_0 = arith.constant 0 : index
    %0 = vector.load %arg1[%c0, %c0_0] : memref<8x128xf32, #tpu.memory_space<vmem>>, vector<8x128xf32>
    %c0_1 = arith.constant 0 : index
    %c0_2 = arith.constant 0 : index
    %1 = vector.load %arg2[%c0_1, %c0_2] : memref<8x128xf32, #tpu.memory_space<vmem>>, vector<8x128xf32>
    tpu.vector_store %arg2[%c0_1, %c0_2], %0 {strides = array<i32>} : memref<8x128xf32, #tpu.memory_space<vmem>>, vector<8x128xf32>,
    return
  }
  func.func @transform_0(%arg0: i32) -> (i32, i32) {
    %c0_i32 = arith.constant 0 : i32
    %c0_i32_0 = arith.constant 0 : i32
    %c0_i32_1 = arith.constant 0 : i32
    return %c0_i32, %c0_i32_0 : i32, i32
  }
  func.func @transform_1(%arg0: i32) -> (i32, i32) {
    %c0_i32 = arith.constant 0 : i32
    %c0_i32_0 = arith.constant 0 : i32
    %c0_i32_1 = arith.constant 0 : i32
    return %c0_i32, %c0_i32_0 : i32, i32
  }
}

module attributes {stable_mosaic.version = 11 : i64} {
  func.func @mlp_head_kernel(%arg0: i32, %arg1: i32, %arg2: memref<1x64x32xf32, #tpu.memory_space<vmem>>, %arg3: memref<32x128xbf16, #tpu.memory_space<vmem>>, %arg4: memref<1x128xf32, #tpu.memory_space<vmem>>, %arg5: memref<1x128xf32, #tpu.memory_space<vmem>>, %arg6: memref<1x128xf32, #tpu.memory_space<vmem>>, %arg7: memref<128x128xbf16, #tpu.memory_space<vmem>>, %arg8: memref<1x128xf32, #tpu.memory_space<vmem>>, %arg9: memref<1x128xf32, #tpu.memory_space<vmem>>, %arg10: memref<1x128xf32, #tpu.memory_space<vmem>>, %arg11: memref<16x128xbf16, #tpu.memory_space<vmem>>, %arg12: memref<16x1xf32, #tpu.memory_space<vmem>>, %arg13: memref<1x16x64xf32, #tpu.memory_space<vmem>>) attributes {dimension_semantics = [#tpu.dimension_semantics<parallel>, #tpu.dimension_semantics<parallel>], iteration_bounds = array<i64: 2, 1>, scalar_prefetch = 0 : i64, scratch_operands = 0 : i64, tpu.core_type = #tpu.core_type<tc>, window_params = [{transform_indices = @transform_0, window_bounds = array<i64: 1, 64, 32>}, {pipeline_mode = #tpu.pipeline_mode<synchronous>, transform_indices = @transform_1, window_bounds = array<i64: 32, 128>}, {pipeline_mode = #tpu.pipeline_mode<synchronous>, transform_indices = @transform_2, window_bounds = array<i64: 1, 128>}, {pipeline_mode = #tpu.pipeline_mode<synchronous>, transform_indices = @transform_3, window_bounds = array<i64: 1, 128>}, {pipeline_mode = #tpu.pipeline_mode<synchronous>, transform_indices = @transform_4, window_bounds = array<i64: 1, 128>}, {pipeline_mode = #tpu.pipeline_mode<synchronous>, transform_indices = @transform_5, window_bounds = array<i64: 128, 128>}, {pipeline_mode = #tpu.pipeline_mode<synchronous>, transform_indices = @transform_6, window_bounds = array<i64: 1, 128>}, {pipeline_mode = #tpu.pipeline_mode<synchronous>, transform_indices = @transform_7, window_bounds = array<i64: 1, 128>}, {pipeline_mode = #tpu.pipeline_mode<synchronous>, transform_indices = @transform_8, window_bounds = array<i64: 1, 128>}, {pipeline_mode = #tpu.pipeline_mode<synchronous>, transform_indices = @transform_9, window_bounds = array<i64: 16, 128>}, {pipeline_mode = #tpu.pipeline_mode<synchronous>, transform_indices = @transform_10, window_bounds = array<i64: 16, 1>}, {transform_indices = @transform_11, window_bounds = array<i64: 1, 16, 64>}]} {
    %c0 = arith.constant 0 : index
    %c0_0 = arith.constant 0 : index
    %c0_1 = arith.constant 0 : index
    %0 = vector.load %arg2[%c0, %c0_0, %c0_1] : memref<1x64x32xf32, #tpu.memory_space<vmem>>, vector<1x64x32xf32>
    %1 = vector.shape_cast %0 : vector<1x64x32xf32> to vector<64x32xf32>
    %2 = arith.truncf %1 : vector<64x32xf32> to vector<64x32xbf16>
    %c0_2 = arith.constant 0 : index
    %c0_3 = arith.constant 0 : index
    %3 = vector.load %arg3[%c0_2, %c0_3] : memref<32x128xbf16, #tpu.memory_space<vmem>>, vector<32x128xbf16>
    %cst = arith.constant dense<0.000000e+00> : vector<64x128xf32>
    %4 = tpu.matmul %2, %3, %cst {dimension_numbers = #tpu.dot_dimension_numbers<[1], [0], [0], [1], [0, 0, 1, 1], [], []>} : vector<64x32xbf16>, vector<32x128xbf16>, vector<64x128xf32> -> vector<64x128xf32>
    %c0_4 = arith.constant 0 : index
    %c0_5 = arith.constant 0 : index
    %5 = vector.load %arg4[%c0_4, %c0_5] : memref<1x128xf32, #tpu.memory_space<vmem>>, vector<1x128xf32>
    %6 = vector.broadcast %5 : vector<1x128xf32> to vector<64x128xf32>
    %7 = arith.addf %4, %6 : vector<64x128xf32>
    %cst_6 = arith.constant dense<0.000000e+00> : vector<64xf32>
    %8 = vector.multi_reduction <add>, %7, %cst_6 [1] : vector<64x128xf32> to vector<64xf32>
    %9 = vector.shape_cast %8 : vector<64xf32> to vector<64x1xf32>
    %cst_7 = arith.constant 1.280000e+02 : f32
    %10 = vector.broadcast %cst_7 : f32 to vector<64x1xf32>
    %11 = arith.divf %9, %10 : vector<64x1xf32>
    %12 = vector.broadcast %11 : vector<64x1xf32> to vector<64x128xf32>
    %13 = arith.subf %7, %12 : vector<64x128xf32>
    %14 = arith.mulf %13, %13 : vector<64x128xf32>
    %cst_8 = arith.constant dense<0.000000e+00> : vector<64xf32>
    %15 = vector.multi_reduction <add>, %14, %cst_8 [1] : vector<64x128xf32> to vector<64xf32>
    %16 = vector.shape_cast %15 : vector<64xf32> to vector<64x1xf32>
    %cst_9 = arith.constant 1.280000e+02 : f32
    %17 = vector.broadcast %cst_9 : f32 to vector<64x1xf32>
    %18 = arith.divf %16, %17 : vector<64x1xf32>
    %19 = vector.broadcast %11 : vector<64x1xf32> to vector<64x128xf32>
    %20 = arith.subf %7, %19 : vector<64x128xf32>
    %cst_10 = arith.constant 9.99999974E-6 : f32
    %21 = vector.broadcast %cst_10 : f32 to vector<64x1xf32>
    %22 = arith.addf %18, %21 : vector<64x1xf32>
    %23 = math.rsqrt %22 : vector<64x1xf32>
    %24 = vector.broadcast %23 : vector<64x1xf32> to vector<64x128xf32>
    %25 = arith.mulf %20, %24 : vector<64x128xf32>
    %c0_11 = arith.constant 0 : index
    %c0_12 = arith.constant 0 : index
    %26 = vector.load %arg5[%c0_11, %c0_12] : memref<1x128xf32, #tpu.memory_space<vmem>>, vector<1x128xf32>
    %27 = vector.broadcast %26 : vector<1x128xf32> to vector<64x128xf32>
    %28 = arith.mulf %25, %27 : vector<64x128xf32>
    %c0_13 = arith.constant 0 : index
    %c0_14 = arith.constant 0 : index
    %29 = vector.load %arg6[%c0_13, %c0_14] : memref<1x128xf32, #tpu.memory_space<vmem>>, vector<1x128xf32>
    %30 = vector.broadcast %29 : vector<1x128xf32> to vector<64x128xf32>
    %31 = arith.addf %28, %30 : vector<64x128xf32>
    %32 = arith.mulf %31, %31 : vector<64x128xf32>
    %33 = arith.mulf %31, %32 : vector<64x128xf32>
    %cst_15 = arith.constant 4.471500e-02 : f32
    %34 = vector.broadcast %cst_15 : f32 to vector<64x128xf32>
    %35 = arith.mulf %34, %33 : vector<64x128xf32>
    %36 = arith.addf %31, %35 : vector<64x128xf32>
    %cst_16 = arith.constant 0.797884583 : f32
    %37 = vector.broadcast %cst_16 : f32 to vector<64x128xf32>
    %38 = arith.mulf %37, %36 : vector<64x128xf32>
    %39 = math.tanh %38 : vector<64x128xf32>
    %cst_17 = arith.constant 1.000000e+00 : f32
    %40 = vector.broadcast %cst_17 : f32 to vector<64x128xf32>
    %41 = arith.addf %40, %39 : vector<64x128xf32>
    %cst_18 = arith.constant 5.000000e-01 : f32
    %42 = vector.broadcast %cst_18 : f32 to vector<64x128xf32>
    %43 = arith.mulf %42, %41 : vector<64x128xf32>
    %44 = arith.mulf %31, %43 : vector<64x128xf32>
    %45 = arith.truncf %44 : vector<64x128xf32> to vector<64x128xbf16>
    %c0_19 = arith.constant 0 : index
    %c0_20 = arith.constant 0 : index
    %46 = vector.load %arg7[%c0_19, %c0_20] : memref<128x128xbf16, #tpu.memory_space<vmem>>, vector<128x128xbf16>
    %cst_21 = arith.constant dense<0.000000e+00> : vector<64x128xf32>
    %47 = tpu.matmul %45, %46, %cst_21 {dimension_numbers = #tpu.dot_dimension_numbers<[1], [0], [0], [1], [0, 0, 1, 1], [], []>} : vector<64x128xbf16>, vector<128x128xbf16>, vector<64x128xf32> -> vector<64x128xf32>
    %c0_22 = arith.constant 0 : index
    %c0_23 = arith.constant 0 : index
    %48 = vector.load %arg8[%c0_22, %c0_23] : memref<1x128xf32, #tpu.memory_space<vmem>>, vector<1x128xf32>
    %49 = vector.broadcast %48 : vector<1x128xf32> to vector<64x128xf32>
    %50 = arith.addf %47, %49 : vector<64x128xf32>
    %cst_24 = arith.constant dense<0.000000e+00> : vector<64xf32>
    %51 = vector.multi_reduction <add>, %50, %cst_24 [1] : vector<64x128xf32> to vector<64xf32>
    %52 = vector.shape_cast %51 : vector<64xf32> to vector<64x1xf32>
    %cst_25 = arith.constant 1.280000e+02 : f32
    %53 = vector.broadcast %cst_25 : f32 to vector<64x1xf32>
    %54 = arith.divf %52, %53 : vector<64x1xf32>
    %55 = vector.broadcast %54 : vector<64x1xf32> to vector<64x128xf32>
    %56 = arith.subf %50, %55 : vector<64x128xf32>
    %57 = arith.mulf %56, %56 : vector<64x128xf32>
    %cst_26 = arith.constant dense<0.000000e+00> : vector<64xf32>
    %58 = vector.multi_reduction <add>, %57, %cst_26 [1] : vector<64x128xf32> to vector<64xf32>
    %59 = vector.shape_cast %58 : vector<64xf32> to vector<64x1xf32>
    %cst_27 = arith.constant 1.280000e+02 : f32
    %60 = vector.broadcast %cst_27 : f32 to vector<64x1xf32>
    %61 = arith.divf %59, %60 : vector<64x1xf32>
    %62 = vector.broadcast %54 : vector<64x1xf32> to vector<64x128xf32>
    %63 = arith.subf %50, %62 : vector<64x128xf32>
    %cst_28 = arith.constant 9.99999974E-6 : f32
    %64 = vector.broadcast %cst_28 : f32 to vector<64x1xf32>
    %65 = arith.addf %61, %64 : vector<64x1xf32>
    %66 = math.rsqrt %65 : vector<64x1xf32>
    %67 = vector.broadcast %66 : vector<64x1xf32> to vector<64x128xf32>
    %68 = arith.mulf %63, %67 : vector<64x128xf32>
    %c0_29 = arith.constant 0 : index
    %c0_30 = arith.constant 0 : index
    %69 = vector.load %arg9[%c0_29, %c0_30] : memref<1x128xf32, #tpu.memory_space<vmem>>, vector<1x128xf32>
    %70 = vector.broadcast %69 : vector<1x128xf32> to vector<64x128xf32>
    %71 = arith.mulf %68, %70 : vector<64x128xf32>
    %c0_31 = arith.constant 0 : index
    %c0_32 = arith.constant 0 : index
    %72 = vector.load %arg10[%c0_31, %c0_32] : memref<1x128xf32, #tpu.memory_space<vmem>>, vector<1x128xf32>
    %73 = vector.broadcast %72 : vector<1x128xf32> to vector<64x128xf32>
    %74 = arith.addf %71, %73 : vector<64x128xf32>
    %75 = arith.mulf %74, %74 : vector<64x128xf32>
    %76 = arith.mulf %74, %75 : vector<64x128xf32>
    %cst_33 = arith.constant 4.471500e-02 : f32
    %77 = vector.broadcast %cst_33 : f32 to vector<64x128xf32>
    %78 = arith.mulf %77, %76 : vector<64x128xf32>
    %79 = arith.addf %74, %78 : vector<64x128xf32>
    %cst_34 = arith.constant 0.797884583 : f32
    %80 = vector.broadcast %cst_34 : f32 to vector<64x128xf32>
    %81 = arith.mulf %80, %79 : vector<64x128xf32>
    %82 = math.tanh %81 : vector<64x128xf32>
    %cst_35 = arith.constant 1.000000e+00 : f32
    %83 = vector.broadcast %cst_35 : f32 to vector<64x128xf32>
    %84 = arith.addf %83, %82 : vector<64x128xf32>
    %cst_36 = arith.constant 5.000000e-01 : f32
    %85 = vector.broadcast %cst_36 : f32 to vector<64x128xf32>
    %86 = arith.mulf %85, %84 : vector<64x128xf32>
    %87 = arith.mulf %74, %86 : vector<64x128xf32>
    %c0_37 = arith.constant 0 : index
    %c0_38 = arith.constant 0 : index
    %88 = vector.load %arg11[%c0_37, %c0_38] : memref<16x128xbf16, #tpu.memory_space<vmem>>, vector<16x128xbf16>
    %89 = arith.truncf %87 : vector<64x128xf32> to vector<64x128xbf16>
    %cst_39 = arith.constant dense<0.000000e+00> : vector<16x64xf32>
    %90 = tpu.matmul %88, %89, %cst_39 {dimension_numbers = #tpu.dot_dimension_numbers<[1], [1], [0], [0], [0, 0, 1, 0], [], []>} : vector<16x128xbf16>, vector<64x128xbf16>, vector<16x64xf32> -> vector<16x64xf32>
    %c0_40 = arith.constant 0 : index
    %c0_41 = arith.constant 0 : index
    %91 = vector.load %arg12[%c0_40, %c0_41] : memref<16x1xf32, #tpu.memory_space<vmem>>, vector<16x1xf32>
    %92 = vector.broadcast %91 : vector<16x1xf32> to vector<16x64xf32>
    %93 = arith.addf %90, %92 : vector<16x64xf32>
    %c0_42 = arith.constant 0 : index
    %c0_43 = arith.constant 0 : index
    %c0_44 = arith.constant 0 : index
    %94 = vector.load %arg13[%c0_42, %c0_43, %c0_44] : memref<1x16x64xf32, #tpu.memory_space<vmem>>, vector<1x16x64xf32>
    %95 = vector.shape_cast %94 : vector<1x16x64xf32> to vector<16x64xf32>
    %96 = vector.shape_cast %93 : vector<16x64xf32> to vector<1x16x64xf32>
    tpu.vector_store %arg13[%c0_42, %c0_43, %c0_44], %96 {strides = array<i32>} : memref<1x16x64xf32, #tpu.memory_space<vmem>>, vector<1x16x64xf32>,
    return
  }
  func.func @transform_0(%arg0: i32, %arg1: i32) -> (i32, i32, i32) {
    %c0_i32 = arith.constant 0 : i32
    %c0_i32_0 = arith.constant 0 : i32
    return %arg0, %arg1, %c0_i32 : i32, i32, i32
  }
  func.func @transform_1(%arg0: i32, %arg1: i32) -> (i32, i32) {
    %c0_i32 = arith.constant 0 : i32
    %c0_i32_0 = arith.constant 0 : i32
    %c0_i32_1 = arith.constant 0 : i32
    return %c0_i32, %c0_i32_0 : i32, i32
  }
  func.func @transform_2(%arg0: i32, %arg1: i32) -> (i32, i32) {
    %c0_i32 = arith.constant 0 : i32
    %c0_i32_0 = arith.constant 0 : i32
    %c0_i32_1 = arith.constant 0 : i32
    return %c0_i32, %c0_i32_0 : i32, i32
  }
  func.func @transform_3(%arg0: i32, %arg1: i32) -> (i32, i32) {
    %c0_i32 = arith.constant 0 : i32
    %c0_i32_0 = arith.constant 0 : i32
    %c0_i32_1 = arith.constant 0 : i32
    return %c0_i32, %c0_i32_0 : i32, i32
  }
  func.func @transform_4(%arg0: i32, %arg1: i32) -> (i32, i32) {
    %c0_i32 = arith.constant 0 : i32
    %c0_i32_0 = arith.constant 0 : i32
    %c0_i32_1 = arith.constant 0 : i32
    return %c0_i32, %c0_i32_0 : i32, i32
  }
  func.func @transform_5(%arg0: i32, %arg1: i32) -> (i32, i32) {
    %c0_i32 = arith.constant 0 : i32
    %c0_i32_0 = arith.constant 0 : i32
    %c0_i32_1 = arith.constant 0 : i32
    return %c0_i32, %c0_i32_0 : i32, i32
  }
  func.func @transform_6(%arg0: i32, %arg1: i32) -> (i32, i32) {
    %c0_i32 = arith.constant 0 : i32
    %c0_i32_0 = arith.constant 0 : i32
    %c0_i32_1 = arith.constant 0 : i32
    return %c0_i32, %c0_i32_0 : i32, i32
  }
  func.func @transform_7(%arg0: i32, %arg1: i32) -> (i32, i32) {
    %c0_i32 = arith.constant 0 : i32
    %c0_i32_0 = arith.constant 0 : i32
    %c0_i32_1 = arith.constant 0 : i32
    return %c0_i32, %c0_i32_0 : i32, i32
  }
  func.func @transform_8(%arg0: i32, %arg1: i32) -> (i32, i32) {
    %c0_i32 = arith.constant 0 : i32
    %c0_i32_0 = arith.constant 0 : i32
    %c0_i32_1 = arith.constant 0 : i32
    return %c0_i32, %c0_i32_0 : i32, i32
  }
  func.func @transform_9(%arg0: i32, %arg1: i32) -> (i32, i32) {
    %c0_i32 = arith.constant 0 : i32
    %c0_i32_0 = arith.constant 0 : i32
    %c0_i32_1 = arith.constant 0 : i32
    return %c0_i32, %c0_i32_0 : i32, i32
  }
  func.func @transform_10(%arg0: i32, %arg1: i32) -> (i32, i32) {
    %c0_i32 = arith.constant 0 : i32
    %c0_i32_0 = arith.constant 0 : i32
    %c0_i32_1 = arith.constant 0 : i32
    return %c0_i32, %c0_i32_0 : i32, i32
  }
  func.func @transform_11(%arg0: i32, %arg1: i32) -> (i32, i32, i32) {
    %c0_i32 = arith.constant 0 : i32
    %c0_i32_0 = arith.constant 0 : i32
    return %arg0, %c0_i32, %arg1 : i32, i32, i32
  }
}

</mosaic_0001>

<llo_original>
// kernel: tpu_custom_call.1
$region0: #{tpu_custom_call.1}
  #allocation0 [shape = 'u32[]', space=smem, size = 0x4, offset = 0x4, fixed_abs, tag = 'smem constant byte address 0x4 - core index']
  #allocation1 [shape = 'u32[144,128]{1,0:T(1,128)}', space=vmem, size = 0x12000, scoped, tag = 'internal scratch']
  %s0 = inlined_call_operand.hbm [shape: f32[8,128], index: 0, kind: input, shape index: {}]
  %s1 = inlined_call_operand.hbm [shape: f32[8,128], index: 1, kind: output, shape index: {}]
  %s2 = sld [smem:[#allocation0]]
  $region18: #{tpu_custom_call.1} parent=0
    _
  %s4 = ssub.s32 1, %s2
  %s5 = scalar_select 0, %s4, %s2
  $region1: #{tpu_custom_call.1} parent=0
    #allocation2 [shape = 'u8[4096]{0}', space=vmem, size = 0x1000, scoped, tag = 'input window, operand 0, single buffered']
    #allocation3 [shape = 's32[1]{0}', space=sflag, size = 0x4, scoped, tag = 'scoped memory for tpu_custom_call.1']
    #allocation4 [shape = 's32[1]{0}', space=sflag, size = 0x4, scoped, tag = 'scoped memory for tpu_custom_call.1']
    #allocation5 [shape = 'u8[4096]{0}', space=vmem, size = 0x1000, scoped, tag = 'output window, operand 0, single buffered']
    %6 = vsyncpa [#allocation3], 0
    %7 = vsyncpa [#allocation4], 0
    // Predicated region
    $region2: #{tpu_custom_call.1} parent=1 // pred_check
      _
    $region3: #{tpu_custom_call.1} parent=1 // pred_check_branch
      %9 = sbr.rel (0) target = $region5
    $region4: #{tpu_custom_call.1} parent=1 // pred_region
      %s11 = ssub.s32 128, 128
      %12 = vsyncadd [#allocation3], %s11
      %s14 = sshll.u32 [#allocation2], 4
      %s15 = int_to_ptr.vmem [resolvable:$true] %s14
      %17 = dma.hbm_to_vmem [thread:$0]  %s0, 128, %s15, [#allocation3]
    $region5: #{tpu_custom_call.1} parent=1 // pred_fallthru
      _
    // Predicated region
    $region6: #{tpu_custom_call.1} parent=1 // pred_check
      _
    $region7: #{tpu_custom_call.1} parent=1 // pred_check_branch
      %19 = sbr.rel (0) target = $region9
    $region8: #{tpu_custom_call.1} parent=1 // pred_region
      %20 = dma.done [#allocation3], 128
    $region9: #{tpu_custom_call.1} parent=1 // pred_fallthru
      _
    %v21 = vld [vmem:[#allocation2] sm:$0xff]
    %v22 = verf.f32.pop %v21
    %23 = vst [vmem:[#allocation5] sm:$0xff] %v22
    // Predicated region
    $region10: #{tpu_custom_call.1} parent=1 // pred_check
      _
    $region11: #{tpu_custom_call.1} parent=1 // pred_check_branch
      %25 = sbr.rel (0) target = $region13
    $region12: #{tpu_custom_call.1} parent=1 // pred_region
      %s27 = ssub.s32 128, 128
      %28 = vsyncadd [#allocation4], %s27
      %s30 = sshll.u32 [#allocation5], 4
      %s31 = int_to_ptr.vmem [resolvable:$true] %s30
      %33 = dma.vmem_to_hbm [thread:$0]  %s31, 128, %s1, [#allocation4]
    $region13: #{tpu_custom_call.1} parent=1 // pred_fallthru
      _
    // Predicated region
    $region14: #{tpu_custom_call.1} parent=1 // pred_check
      _
    $region15: #{tpu_custom_call.1} parent=1 // pred_check_branch
      %35 = sbr.rel (0) target = $region17
    $region16: #{tpu_custom_call.1} parent=1 // pred_region
      %36 = dma.done [#allocation4], 128
    $region17: #{tpu_custom_call.1} parent=1 // pred_fallthru
      _
    %37 = vsyncpa [#allocation3], 1
    %38 = vsyncpa [#allocation4], 1

// kernel: tpu_custom_call.1
$region0: #{tpu_custom_call.1}
  #allocation0 [shape = 'u32[]', space=smem, size = 0x4, offset = 0x4, fixed_abs, tag = 'smem constant byte address 0x4 - core index']
  #allocation1 [shape = 'u32[144,128]{1,0:T(1,128)}', space=vmem, size = 0x12000, scoped, tag = 'internal scratch']
  %s0 = inlined_call_operand.hbm [shape: f32[8,128], index: 0, kind: input, shape index: {}]
  %s1 = inlined_call_operand.hbm [shape: f32[8,128], index: 1, kind: output, shape index: {}]
  %s2 = sld [smem:[#allocation0]]
  $region18: #{tpu_custom_call.1} parent=0
    _
  %s4 = ssub.s32 1, %s2
  %s5 = scalar_select 0, %s4, %s2
  $region1: #{tpu_custom_call.1} parent=0
    #allocation2 [shape = 'u8[4096]{0}', space=vmem, size = 0x1000, scoped, tag = 'input window, operand 0, single buffered']
    #allocation3 [shape = 's32[1]{0}', space=sflag, size = 0x4, scoped, tag = 'scoped memory for tpu_custom_call.1']
    #allocation4 [shape = 's32[1]{0}', space=sflag, size = 0x4, scoped, tag = 'scoped memory for tpu_custom_call.1']
    #allocation5 [shape = 'u8[4096]{0}', space=vmem, size = 0x1000, scoped, tag = 'output window, operand 0, single buffered']
    %6 = vsyncpa [#allocation3], 0
    %7 = vsyncpa [#allocation4], 0
    // Predicated region
    $region2: #{tpu_custom_call.1} parent=1 // pred_check
      _
    $region3: #{tpu_custom_call.1} parent=1 // pred_check_branch
      %9 = sbr.rel (0) target = $region5
    $region4: #{tpu_custom_call.1} parent=1 // pred_region
      %s11 = ssub.s32 128, 128
      %12 = vsyncadd [#allocation3], %s11
      %s14 = sshll.u32 [#allocation2], 4
      %s15 = int_to_ptr.vmem [resolvable:$true] %s14
      %17 = dma.hbm_to_vmem [thread:$0]  %s0, 128, %s15, [#allocation3]
    $region5: #{tpu_custom_call.1} parent=1 // pred_fallthru
      _
    // Predicated region
    $region6: #{tpu_custom_call.1} parent=1 // pred_check
      _
    $region7: #{tpu_custom_call.1} parent=1 // pred_check_branch
      %19 = sbr.rel (0) target = $region9
    $region8: #{tpu_custom_call.1} parent=1 // pred_region
      %20 = dma.done [#allocation3], 128
    $region9: #{tpu_custom_call.1} parent=1 // pred_fallthru
      _
    %v21 = vld [vmem:[#allocation2] sm:$0xff]
    %22 = vst [vmem:[#allocation5] sm:$0xff] %v21
    // Predicated region
    $region10: #{tpu_custom_call.1} parent=1 // pred_check
      _
    $region11: #{tpu_custom_call.1} parent=1 // pred_check_branch
      %24 = sbr.rel (0) target = $region13
    $region12: #{tpu_custom_call.1} parent=1 // pred_region
      %s26 = ssub.s32 128, 128
      %27 = vsyncadd [#allocation4], %s26
      %s29 = sshll.u32 [#allocation5], 4
      %s30 = int_to_ptr.vmem [resolvable:$true] %s29
      %32 = dma.vmem_to_hbm [thread:$0]  %s30, 128, %s1, [#allocation4]
    $region13: #{tpu_custom_call.1} parent=1 // pred_fallthru
      _
    // Predicated region
    $region14: #{tpu_custom_call.1} parent=1 // pred_check
      _
    $region15: #{tpu_custom_call.1} parent=1 // pred_check_branch
      %34 = sbr.rel (0) target = $region17
    $region16: #{tpu_custom_call.1} parent=1 // pred_region
      %35 = dma.done [#allocation4], 128
    $region17: #{tpu_custom_call.1} parent=1 // pred_fallthru
      _
    %36 = vsyncpa [#allocation3], 1
    %37 = vsyncpa [#allocation4], 1

// kernel: tpu_custom_call.1
$region0: #{tpu_custom_call.1}
  #allocation0 [shape = 'u32[]', space=smem, size = 0x4, offset = 0x4, fixed_abs, tag = 'smem constant byte address 0x4 - core index']
  #allocation1 [shape = 'u32[144,128]{1,0:T(1,128)}', space=vmem, size = 0x12000, scoped, tag = 'internal scratch']
  %s0 = inlined_call_operand.vmem [shape: f32[2,64,32], index: 0, kind: input, shape index: {}]
  %s1 = inlined_call_operand.vmem [shape: bf16[32,128], index: 1, kind: input, shape index: {}]
  %s2 = inlined_call_operand.vmem [shape: f32[1,128], index: 2, kind: input, shape index: {}]
  %s3 = inlined_call_operand.vmem [shape: f32[1,128], index: 3, kind: input, shape index: {}]
  %s4 = inlined_call_operand.vmem [shape: f32[1,128], index: 4, kind: input, shape index: {}]
  %s5 = inlined_call_operand.vmem [shape: bf16[128,128], index: 5, kind: input, shape index: {}]
  %s6 = inlined_call_operand.vmem [shape: f32[1,128], index: 6, kind: input, shape index: {}]
  %s7 = inlined_call_operand.vmem [shape: f32[1,128], index: 7, kind: input, shape index: {}]
  %s8 = inlined_call_operand.vmem [shape: f32[1,128], index: 8, kind: input, shape index: {}]
  %s9 = inlined_call_operand.vmem [shape: bf16[16,128], index: 9, kind: input, shape index: {}]
  %s10 = inlined_call_operand.vmem [shape: f32[16,1], index: 10, kind: input, shape index: {}]
  %s11 = inlined_call_operand.hbm [shape: f32[2,16,64], index: 11, kind: output, shape index: {}]
  %s12 = sld [smem:[#allocation0]]
  $region77: #{tpu_custom_call.1} parent=0
    _
  %s14 = ssub.s32 1, %s12
  %s15 = scalar_select 0, %s14, %s12
  $region1: #{tpu_custom_call.1} parent=0
    #allocation2 [shape = 'u8[16384]{0}', space=vmem, size = 0x4000, scoped, tag = 'output window, operand 0']
    #allocation3 [shape = 's32[2]{0}', space=sflag, size = 0x8, scoped, tag = 'scoped memory for tpu_custom_call.1']
    %16 = vsyncpa [#allocation3], 0
    %s17 = scalar_lea.sflag [#allocation3], 1
    %18 = vsyncpa %s17, 0
    loop: start=0, step=1, limit=4
    $region2: #{tpu_custom_call.1} parent=1 // loop_pre_header
      _
    $region3: #{tpu_custom_call.1} parent=1 // loop_header
      %s20 = sphi 0, %s24
      %p21 = scmp.ge.s32.totalorder %s20, 4
      %s27 = sphi 0, %s39
      %s28 = sphi 0, %s35
      %s29 = sphi 0, %s27
      %s30 = sphi 0, %s28
      %s31 = sphi 0, %s29
      %s32 = sphi 0, %s30
      %s44 = sphi 0, %s46
      %s47 = sphi 0, %s44
      %s48 = sphi 0, %s47
      %s64 = sphi 0, %s48
      %s68 = sphi 0, %s68
      %s70 = sphi 0, %s68
      %s71 = sphi 0, %s70
      %s85 = sphi 0, %s71
      %s89 = sphi 0, %s89
      %s91 = sphi 0, %s89
      %s92 = sphi 0, %s91
      %s106 = sphi 0, %s92
      %s110 = sphi 0, %s110
      %s112 = sphi 0, %s110
      %s113 = sphi 0, %s112
      %s127 = sphi 0, %s113
      %s131 = sphi 0, %s131
      %s133 = sphi 0, %s131
      %s134 = sphi 0, %s133
      %s148 = sphi 0, %s134
      %s152 = sphi 0, %s152
      %s154 = sphi 0, %s152
      %s155 = sphi 0, %s154
      %s169 = sphi 0, %s155
      %s173 = sphi 0, %s173
      %s175 = sphi 0, %s173
      %s176 = sphi 0, %s175
      %s190 = sphi 0, %s176
      %s194 = sphi 0, %s194
      %s196 = sphi 0, %s194
      %s197 = sphi 0, %s196
      %s211 = sphi 0, %s197
      %s215 = sphi 0, %s215
      %s217 = sphi 0, %s215
      %s218 = sphi 0, %s217
      %s232 = sphi 0, %s218
      %s236 = sphi 0, %s236
      %s238 = sphi 0, %s236
      %s239 = sphi 0, %s238
      %s253 = sphi 0, %s239
      %s257 = sphi 0, %s257
      %s259 = sphi 0, %s257
      %s260 = sphi 0, %s259
      %s274 = sphi 0, %s260
      %s282 = sphi 0, %s284
      %s285 = sphi 0, %s282
      %s286 = sphi 0, %s285
      %s302 = sphi 0, %s286
    $region4: #{tpu_custom_call.1} parent=1 // loop_header_branch
      %23 = sbr.rel (%p21) target = $region8
    $region5: #{tpu_custom_call.1} parent=1 // loop_body
      %s25 = ssub.s32 %s20, 1
      %s26 = ssub.s32 %s20, 2
      %s33 = sadd.s32 1, %s28
      %p34 = scmp.ge.s32.totalorder %s33, 1
      %s35 = scalar_select %p34, 0, %s33
      %s36 = sadd.s32 1, %s27
      %s37 = scalar_select %p34, %s36, %s27
      %p38 = scmp.ge.s32.totalorder %s37, 2
      %s39 = scalar_select %p38, 0, %s37
      %s40 = ssub.s32 %s27, %s39
      %s41 = ssub.s32 %s28, %s35
      %s42 = sor.u32 %s40, %s41
      %p43 = scmp.eq.s32.totalorder %s42, 0
      %s45 = sadd.s32 %s44, 1
      %s46 = scalar_select %p43, %s44, %s45
      %p49 = pneg %p43
      %p50 = scmp.eq.s32.totalorder %s20, 1
      %p51 = por %p49, %p50
      %p52 = scmp.ne.s32.totalorder %s44, %s47
      %p53 = scmp.eq.s32.totalorder %s20, 0
      %p54 = por %p52, %p53
      %p55 = scmp.ne.s32.totalorder %s44, %s47
      %p56 = scmp.eq.s32.totalorder %s25, 1
      %p57 = por %p55, %p56
      %p58 = scmp.ne.s32.totalorder %s47, %s48
      %p59 = scmp.eq.s32.totalorder %s25, 0
      %p60 = por %p58, %p59
      %p61 = scmp.ne.s32.totalorder %s47, %s48
      %p62 = scmp.eq.s32.totalorder %s26, 1
      %p63 = por %p61, %p62
      %p65 = scmp.ne.s32.totalorder %s48, %s64
      %p66 = scmp.eq.s32.totalorder %s26, 0
      %p67 = por %p65, %p66
      %s69 = sadd.s32 %s68, 1
      %p72 = scmp.eq.s32.totalorder %s20, 1
      %p73 = scmp.ne.s32.totalorder %s68, %s70
      %p74 = scmp.eq.s32.totalorder %s20, 0
      %p75 = por %p73, %p74
      %p76 = scmp.ne.s32.totalorder %s68, %s70
      %p77 = scmp.eq.s32.totalorder %s25, 1
      %p78 = por %p76, %p77
      %p79 = scmp.ne.s32.totalorder %s70, %s71
      %p80 = scmp.eq.s32.totalorder %s25, 0
      %p81 = por %p79, %p80
      %p82 = scmp.ne.s32.totalorder %s70, %s71
      %p83 = scmp.eq.s32.totalorder %s26, 1
      %p84 = por %p82, %p83
      %p86 = scmp.ne.s32.totalorder %s71, %s85
      %p87 = scmp.eq.s32.totalorder %s26, 0
      %p88 = por %p86, %p87
      %s90 = sadd.s32 %s89, 1
      %p93 = scmp.eq.s32.totalorder %s20, 1
      %p94 = scmp.ne.s32.totalorder %s89, %s91
      %p95 = scmp.eq.s32.totalorder %s20, 0
      %p96 = por %p94, %p95
      %p97 = scmp.ne.s32.totalorder %s89, %s91
      %p98 = scmp.eq.s32.totalorder %s25, 1
      %p99 = por %p97, %p98
      %p100 = scmp.ne.s32.totalorder %s91, %s92
      %p101 = scmp.eq.s32.totalorder %s25, 0
      %p102 = por %p100, %p101
      %p103 = scmp.ne.s32.totalorder %s91, %s92
      %p104 = scmp.eq.s32.totalorder %s26, 1
      %p105 = por %p103, %p104
      %p107 = scmp.ne.s32.totalorder %s92, %s106
      %p108 = scmp.eq.s32.totalorder %s26, 0
      %p109 = por %p107, %p108
      %s111 = sadd.s32 %s110, 1
      %p114 = scmp.eq.s32.totalorder %s20, 1
      %p115 = scmp.ne.s32.totalorder %s110, %s112
      %p116 = scmp.eq.s32.totalorder %s20, 0
      %p117 = por %p115, %p116
      %p118 = scmp.ne.s32.totalorder %s110, %s112
      %p119 = scmp.eq.s32.totalorder %s25, 1
      %p120 = por %p118, %p119
      %p121 = scmp.ne.s32.totalorder %s112, %s113
      %p122 = scmp.eq.s32.totalorder %s25, 0
      %p123 = por %p121, %p122
      %p124 = scmp.ne.s32.totalorder %s112, %s113
      %p125 = scmp.eq.s32.totalorder %s26, 1
      %p126 = por %p124, %p125
      %p128 = scmp.ne.s32.totalorder %s113, %s127
      %p129 = scmp.eq.s32.totalorder %s26, 0
      %p130 = por %p128, %p129
      %s132 = sadd.s32 %s131, 1
      %p135 = scmp.eq.s32.totalorder %s20, 1
      %p136 = scmp.ne.s32.totalorder %s131, %s133
      %p137 = scmp.eq.s32.totalorder %s20, 0
      %p138 = por %p136, %p137
      %p139 = scmp.ne.s32.totalorder %s131, %s133
      %p140 = scmp.eq.s32.totalorder %s25, 1
      %p141 = por %p139, %p140
      %p142 = scmp.ne.s32.totalorder %s133, %s134
      %p143 = scmp.eq.s32.totalorder %s25, 0
      %p144 = por %p142, %p143
      %p145 = scmp.ne.s32.totalorder %s133, %s134
      %p146 = scmp.eq.s32.totalorder %s26, 1
      %p147 = por %p145, %p146
      %p149 = scmp.ne.s32.totalorder %s134, %s148
      %p150 = scmp.eq.s32.totalorder %s26, 0
      %p151 = por %p149, %p150
      %s153 = sadd.s32 %s152, 1
      %p156 = scmp.eq.s32.totalorder %s20, 1
      %p157 = scmp.ne.s32.totalorder %s152, %s154
      %p158 = scmp.eq.s32.totalorder %s20, 0
      %p159 = por %p157, %p158
      %p160 = scmp.ne.s32.totalorder %s152, %s154
      %p161 = scmp.eq.s32.totalorder %s25, 1
      %p162 = por %p160, %p161
      %p163 = scmp.ne.s32.totalorder %s154, %s155
      %p164 = scmp.eq.s32.totalorder %s25, 0
      %p165 = por %p163, %p164
      %p166 = scmp.ne.s32.totalorder %s154, %s155
      %p167 = scmp.eq.s32.totalorder %s26, 1
      %p168 = por %p166, %p167
      %p170 = scmp.ne.s32.totalorder %s155, %s169
      %p171 = scmp.eq.s32.totalorder %s26, 0
      %p172 = por %p170, %p171
      %s174 = sadd.s32 %s173, 1
      %p177 = scmp.eq.s32.totalorder %s20, 1
      %p178 = scmp.ne.s32.totalorder %s173, %s175
      %p179 = scmp.eq.s32.totalorder %s20, 0
      %p180 = por %p178, %p179
      %p181 = scmp.ne.s32.totalorder %s173, %s175
      %p182 = scmp.eq.s32.totalorder %s25, 1
      %p183 = por %p181, %p182
      %p184 = scmp.ne.s32.totalorder %s175, %s176
      %p185 = scmp.eq.s32.totalorder %s25, 0
      %p186 = por %p184, %p185
      %p187 = scmp.ne.s32.totalorder %s175, %s176
      %p188 = scmp.eq.s32.totalorder %s26, 1
      %p189 = por %p187, %p188
      %p191 = scmp.ne.s32.totalorder %s176, %s190
      %p192 = scmp.eq.s32.totalorder %s26, 0
      %p193 = por %p191, %p192
      %s195 = sadd.s32 %s194, 1
      %p198 = scmp.eq.s32.totalorder %s20, 1
      %p199 = scmp.ne.s32.totalorder %s194, %s196
      %p200 = scmp.eq.s32.totalorder %s20, 0
      %p201 = por %p199, %p200
      %p202 = scmp.ne.s32.totalorder %s194, %s196
      %p203 = scmp.eq.s32.totalorder %s25, 1
      %p204 = por %p202, %p203
      %p205 = scmp.ne.s32.totalorder %s196, %s197
      %p206 = scmp.eq.s32.totalorder %s25, 0
      %p207 = por %p205, %p206
      %p208 = scmp.ne.s32.totalorder %s196, %s197
      %p209 = scmp.eq.s32.totalorder %s26, 1
      %p210 = por %p208, %p209
      %p212 = scmp.ne.s32.totalorder %s197, %s211
      %p213 = scmp.eq.s32.totalorder %s26, 0
      %p214 = por %p212, %p213
      %s216 = sadd.s32 %s215, 1
      %p219 = scmp.eq.s32.totalorder %s20, 1
      %p220 = scmp.ne.s32.totalorder %s215, %s217
      %p221 = scmp.eq.s32.totalorder %s20, 0
      %p222 = por %p220, %p221
      %p223 = scmp.ne.s32.totalorder %s215, %s217
      %p224 = scmp.eq.s32.totalorder %s25, 1
      %p225 = por %p223, %p224
      %p226 = scmp.ne.s32.totalorder %s217, %s218
      %p227 = scmp.eq.s32.totalorder %s25, 0
      %p228 = por %p226, %p227
      %p229 = scmp.ne.s32.totalorder %s217, %s218
      %p230 = scmp.eq.s32.totalorder %s26, 1
      %p231 = por %p229, %p230
      %p233 = scmp.ne.s32.totalorder %s218, %s232
      %p234 = scmp.eq.s32.totalorder %s26, 0
      %p235 = por %p233, %p234
      %s237 = sadd.s32 %s236, 1
      %p240 = scmp.eq.s32.totalorder %s20, 1
      %p241 = scmp.ne.s32.totalorder %s236, %s238
      %p242 = scmp.eq.s32.totalorder %s20, 0
      %p243 = por %p241, %p242
      %p244 = scmp.ne.s32.totalorder %s236, %s238
      %p245 = scmp.eq.s32.totalorder %s25, 1
      %p246 = por %p244, %p245
      %p247 = scmp.ne.s32.totalorder %s238, %s239
      %p248 = scmp.eq.s32.totalorder %s25, 0
      %p249 = por %p247, %p248
      %p250 = scmp.ne.s32.totalorder %s238, %s239
      %p251 = scmp.eq.s32.totalorder %s26, 1
      %p252 = por %p250, %p251
      %p254 = scmp.ne.s32.totalorder %s239, %s253
      %p255 = scmp.eq.s32.totalorder %s26, 0
      %p256 = por %p254, %p255
      %s258 = sadd.s32 %s257, 1
      %p261 = scmp.eq.s32.totalorder %s20, 1
      %p262 = scmp.ne.s32.totalorder %s257, %s259
      %p263 = scmp.eq.s32.totalorder %s20, 0
      %p264 = por %p262, %p263
      %p265 = scmp.ne.s32.totalorder %s257, %s259
      %p266 = scmp.eq.s32.totalorder %s25, 1
      %p267 = por %p265, %p266
      %p268 = scmp.ne.s32.totalorder %s259, %s260
      %p269 = scmp.eq.s32.totalorder %s25, 0
      %p270 = por %p268, %p269
      %p271 = scmp.ne.s32.totalorder %s259, %s260
      %p272 = scmp.eq.s32.totalorder %s26, 1
      %p273 = por %p271, %p272
      %p275 = scmp.ne.s32.totalorder %s260, %s274
      %p276 = scmp.eq.s32.totalorder %s26, 0
      %p277 = por %p275, %p276
      %s278 = ssub.s32 %s27, %s39
      %s279 = ssub.s32 %s28, %s35
      %s280 = sor.u32 %s278, %s279
      %p281 = scmp.eq.s32.totalorder %s280, 0
      %s283 = sadd.s32 %s282, 1
      %s284 = scalar_select %p281, %s282, %s283
      %p287 = pneg %p281
      %p288 = scmp.eq.s32.totalorder %s20, 1
      %p289 = por %p287, %p288
      %p290 = scmp.ne.s32.totalorder %s282, %s285
      %p291 = scmp.eq.s32.totalorder %s20, 0
      %p292 = por %p290, %p291
      %p293 = scmp.ne.s32.totalorder %s282, %s285
      %p294 = scmp.eq.s32.totalorder %s25, 1
      %p295 = por %p293, %p294
      %p296 = scmp.ne.s32.totalorder %s285, %s286
      %p297 = scmp.eq.s32.totalorder %s25, 0
      %p298 = por %p296, %p297
      %p299 = scmp.ne.s32.totalorder %s285, %s286
      %p300 = scmp.eq.s32.totalorder %s26, 1
      %p301 = por %p299, %p300
      %p303 = scmp.ne.s32.totalorder %s286, %s302
      %p304 = scmp.eq.s32.totalorder %s26, 0
      %p305 = por %p303, %p304
      %p306 = scmp.le.s32.totalorder 1, %s20
      %p307 = scmp.lt.s32.totalorder %s20, 3
      %p308 = pnand %p306, %p307
      %p309 = pneg %p308
      // Predicated region
      $region9: #{tpu_custom_call.1} parent=5 // pred_check
        _
      $region10: #{tpu_custom_call.1} parent=5 // pred_check_branch
        %311 = sbr.rel (%p308) target = $region12
      $region11: #{tpu_custom_call.1} parent=5 // pred_region
        %s312 = ssub.s32 %s20, 1
        // Predicated region
        $region13: #{tpu_custom_call.1} parent=11 // pred_check
          %p313 = pneg %p81
        $region14: #{tpu_custom_call.1} parent=11 // pred_check_branch
          %315 = sbr.rel (%p313) target = $region16
        $region15: #{tpu_custom_call.1} parent=11 // pred_region
          _
        $region16: #{tpu_custom_call.1} parent=11 // pred_fallthru
          _
        // Predicated region
        $region17: #{tpu_custom_call.1} parent=11 // pred_check
          %p316 = pneg %p102
        $region18: #{tpu_custom_call.1} parent=11 // pred_check_branch
          %318 = sbr.rel (%p316) target = $region20
        $region19: #{tpu_custom_call.1} parent=11 // pred_region
          _
        $region20: #{tpu_custom_call.1} parent=11 // pred_fallthru
          _
        // Predicated region
        $region21: #{tpu_custom_call.1} parent=11 // pred_check
          %p319 = pneg %p123
        $region22: #{tpu_custom_call.1} parent=11 // pred_check_branch
          %321 = sbr.rel (%p319) target = $region24
        $region23: #{tpu_custom_call.1} parent=11 // pred_region
          _
        $region24: #{tpu_custom_call.1} parent=11 // pred_fallthru
          _
        // Predicated region
        $region25: #{tpu_custom_call.1} parent=11 // pred_check
          %p322 = pneg %p144
        $region26: #{tpu_custom_call.1} parent=11 // pred_check_branch
          %324 = sbr.rel (%p322) target = $region28
        $region27: #{tpu_custom_call.1} parent=11 // pred_region
          _
        $region28: #{tpu_custom_call.1} parent=11 // pred_fallthru
          _
        // Predicated region
        $region29: #{tpu_custom_call.1} parent=11 // pred_check
          %p325 = pneg %p165
        $region30: #{tpu_custom_call.1} parent=11 // pred_check_branch
          %327 = sbr.rel (%p325) target = $region32
        $region31: #{tpu_custom_call.1} parent=11 // pred_region
          _
        $region32: #{tpu_custom_call.1} parent=11 // pred_fallthru
          _
        // Predicated region
        $region33: #{tpu_custom_call.1} parent=11 // pred_check
          %p328 = pneg %p186
        $region34: #{tpu_custom_call.1} parent=11 // pred_check_branch
          %330 = sbr.rel (%p328) target = $region36
        $region35: #{tpu_custom_call.1} parent=11 // pred_region
          _
        $region36: #{tpu_custom_call.1} parent=11 // pred_fallthru
          _
        // Predicated region
        $region37: #{tpu_custom_call.1} parent=11 // pred_check
          %p331 = pneg %p207
        $region38: #{tpu_custom_call.1} parent=11 // pred_check_branch
          %333 = sbr.rel (%p331) target = $region40
        $region39: #{tpu_custom_call.1} parent=11 // pred_region
          _
        $region40: #{tpu_custom_call.1} parent=11 // pred_fallthru
          _
        // Predicated region
        $region41: #{tpu_custom_call.1} parent=11 // pred_check
          %p334 = pneg %p228
        $region42: #{tpu_custom_call.1} parent=11 // pred_check_branch
          %336 = sbr.rel (%p334) target = $region44
        $region43: #{tpu_custom_call.1} parent=11 // pred_region
          _
        $region44: #{tpu_custom_call.1} parent=11 // pred_fallthru
          _
        // Predicated region
        $region45: #{tpu_custom_call.1} parent=11 // pred_check
          %p337 = pneg %p249
        $region46: #{tpu_custom_call.1} parent=11 // pred_check_branch
          %339 = sbr.rel (%p337) target = $region48
        $region47: #{tpu_custom_call.1} parent=11 // pred_region
          _
        $region48: #{tpu_custom_call.1} parent=11 // pred_fallthru
          _
        // Predicated region
        $region49: #{tpu_custom_call.1} parent=11 // pred_check
          %p340 = pneg %p270
        $region50: #{tpu_custom_call.1} parent=11 // pred_check_branch
          %342 = sbr.rel (%p340) target = $region52
        $region51: #{tpu_custom_call.1} parent=11 // pred_region
          _
        $region52: #{tpu_custom_call.1} parent=11 // pred_fallthru
          _
      $region12: #{tpu_custom_call.1} parent=5 // pred_fallthru
        _
      %p343 = scmp.lt.s32.totalorder %s20, 2
      // Predicated region
      $region53: #{tpu_custom_call.1} parent=5 // pred_check
        %p344 = pneg %p343
      $region54: #{tpu_custom_call.1} parent=5 // pred_check_branch
        %346 = sbr.rel (%p344) target = $region56
      $region55: #{tpu_custom_call.1} parent=5 // pred_region
        // Predicated region
        $region57: #{tpu_custom_call.1} parent=55 // pred_check
          %p347 = pneg %p54
        $region58: #{tpu_custom_call.1} parent=55 // pred_check_branch
          %349 = sbr.rel (%p347) target = $region60
        $region59: #{tpu_custom_call.1} parent=55 // pred_region
          %s350 = smul.u32 8, %s28
          %p351 = scmp.lt.s32.totalorder %s27, 1
          %s352 = scalar_select %p351, %s27, 1
          %p353 = scmp.lt.s32.totalorder %s350, 7
          %s354 = scalar_select %p353, %s350, 7
          %s355 = smul.addr %s352, 8
          %s356 = sadd.s32 %s354, %s355
          %s357 = smul.addr %s356, 8
          %s358 = scalar_lea.vmem %s0, %s357
          %s359 = smul.u32 8, %s28
        $region60: #{tpu_custom_call.1} parent=55 // pred_fallthru
          _
      $region56: #{tpu_custom_call.1} parent=5 // pred_fallthru
        _
      %p360 = scmp.le.s32.totalorder 1, %s20
      %p361 = scmp.lt.s32.totalorder %s20, 3
      %p362 = pnand %p360, %p361
      %p363 = pneg %p362
      // Predicated region
      $region61: #{tpu_custom_call.1} parent=5 // pred_check
        _
      $region62: #{tpu_custom_call.1} parent=5 // pred_check_branch
        %365 = sbr.rel (%p362) target = $region64
      $region63: #{tpu_custom_call.1} parent=5 // pred_region
        %s366 = ssub.s32 %s20, 1
        %s367 = smul.u32 8, %s30
        %p368 = scmp.lt.s32.totalorder %s29, 1
        %s369 = scalar_select %p368, %s29, 1
        %p370 = scmp.lt.s32.totalorder %s367, 7
        %s371 = scalar_select %p370, %s367, 7
        %s372 = smul.addr %s369, 8
        %s373 = sadd.s32 %s371, %s372
        %s374 = smul.addr %s373, 8
        %s375 = scalar_lea.vmem %s0, %s374
        %p376 = pneg %p60
        %p377 = pneg %p57
        %p378 = pneg %p81
        %p379 = pneg %p78
        %p380 = pneg %p102
        %p381 = pneg %p99
        %p382 = pneg %p123
        %p383 = pneg %p120
        %p384 = pneg %p144
        %p385 = pneg %p141
        %p386 = pneg %p165
        %p387 = pneg %p162
        %p388 = pneg %p186
        %p389 = pneg %p183
        %p390 = pneg %p207
        %p391 = pneg %p204
        %p392 = pneg %p228
        %p393 = pneg %p225
        %p394 = pneg %p249
        %p395 = pneg %p246
        %p396 = pneg %p270
        %p397 = pneg %p267
        %p398 = pneg %p298
        %p399 = pneg %p295
        %s400 = sand.u32 %s285, 1
        %s401 = scalar_lea.sflag [#allocation3], %s400
        %s402 = sand.u32 %s285, 1
        %s403 = smul.addr %s402, 16
        %s404 = scalar_lea.vmem [#allocation2], %s403
        %s405 = smul.u32 8, %s30
        %p406 = scmp.lt.s32.totalorder %s29, 1
        %s407 = scalar_select %p406, %s29, 1
        %p408 = scmp.lt.s32.totalorder %s405, 7
        %s409 = scalar_select %p408, %s405, 7
        %s410 = smul.addr %s407, 8
        %s411 = sadd.s32 %s409, %s410
        %s412 = smul.addr %s411, 8
        %s413 = scalar_lea.vmem %s0, %s412
        %s414 = smul.u32 8, %s30
        %v416 = vld [vmem:[%s413] sm:$0xff]
        %v417 = vld [vmem:[%s413 + $0x8] sm:$0xff]
        %v418 = vld [vmem:[%s413 + $0x10] sm:$0xff]
        %v419 = vld [vmem:[%s413 + $0x18] sm:$0xff]
        %v420 = vld [vmem:[%s413 + $0x20] sm:$0xff]
        %v421 = vld [vmem:[%s413 + $0x28] sm:$0xff]
        %v422 = vld [vmem:[%s413 + $0x30] sm:$0xff]
        %v423 = vld [vmem:[%s413 + $0x38] sm:$0xff]
        %v424 = vpack.c.bf16 %v417, %v416
        %v425 = vpack.c.bf16 %v419, %v418
        %v426 = vpack.c.bf16 %v421, %v420
        %v427 = vpack.c.bf16 %v423, %v422
        %v428 = vld [vmem:[%s1] sm:$0xf]
        %v429 = vld [vmem:[%s1 + $0x4] sm:$0xf]
        %v430 = vld [vmem:[%s1 + $0x8] sm:$0xf]
        %v431 = vld [vmem:[%s1 + $0xc] sm:$0xf]
        %v432 = vld [vmem:[%s2] sm:$0x1]
        %v434 = vlaneseq
        %v435 = vshrl.u32 %v434, 7
        %v436 = vsub.s32 0, %v435
        %v437 = vrot.slane %v432, %v436
        %v443 = vunpack.c.l.b16 %v428
        %v444 = vunpack.c.l.b16 %v429
        %v445 = vunpack.c.l.b16 %v430
        %v446 = vunpack.c.l.b16 %v431
        %v447 = vpack.c.b16 %v444, %v443
        %v448 = vpack.c.b16 %v446, %v445
        %vm451 = vcmask 261120
        %v453 = vsel %vm451, %v424, 0
        %v456 = vsel %vm451, %v425, 0
        %v459 = vsel %vm451, %v426, 0
        %v462 = vsel %vm451, %v427, 0
        %464 = vmatprep.subr.bf16.mxu0 0
        %465 = vmatpush1.bf16.msra.mxu0 %v447
        %466 = vmatprep.subr.bf16.mxu0 0
        %467 = vmatpush1.bf16.msra.mxu0 %v448
        %468 = vmatprep.subr.bf16.mxu0 0
        %469 = vmatpush1.bf16.msra.mxu0 0
        %470 = vmatprep.subr.bf16.mxu0 0
        %471 = vmatpush1.bf16.msra.mxu0 0
        %472 = vmatprep.subr.bf16.mxu0 0
        %473 = vmatpush1.bf16.msra.mxu0 0
        %474 = vmatprep.subr.bf16.mxu0 0
        %475 = vmatpush1.bf16.msra.mxu0 0
        %476 = vmatprep.subr.bf16.mxu0 0
        %477 = vmatpush1.bf16.msra.mxu0 0
        %478 = vmatprep.subr.bf16.mxu0 0
        %479 = vmatpush1.bf16.msra.mxu0 0
        %480 = vmatprep.subr.bf16.mxu0 0
        %481 = vmatpush1.bf16.msra.mxu0 0
        %482 = vmatprep.subr.bf16.mxu0 0
        %483 = vmatpush1.bf16.msra.mxu0 0
        %484 = vmatprep.subr.bf16.mxu0 0
        %485 = vmatpush1.bf16.msra.mxu0 0
        %486 = vmatprep.subr.bf16.mxu0 0
        %487 = vmatpush1.bf16.msra.mxu0 0
        %488 = vmatprep.subr.bf16.mxu0 0
        %489 = vmatpush1.bf16.msra.mxu0 0
        %490 = vmatprep.subr.bf16.mxu0 0
        %491 = vmatpush1.bf16.msra.mxu0 0
        %492 = vmatprep.subr.bf16.mxu0 0
        %493 = vmatpush1.bf16.msra.mxu0 0
        %494 = vmatprep.subr.bf16.mxu0 0
        %495 = vmatpush1.bf16.msra.mxu0 0
        %496 = vmatprep.mubr.bf16.mxu0 0
        %497 = vmatmul.mubr.bf16.gmra.mrb[0].mxu0 %v453
        %v498 = vpop.f32.mrb[0].mxu0
        %v499 = vadd.f32 %v437, %v498
        %v500 = vpop.f32.mrb[0].mxu0
        %v501 = vpop.f32.mrb[0].mxu0
        %v502 = vadd.f32 %v437, %v501
        %v503 = vpop.f32.mrb[0].mxu0
        %504 = vmatprep.mubr.bf16.mxu0 0
        %505 = vmatmul.mubr.bf16.gmra.mrb[0].mxu0 %v456
        %v506 = vpop.f32.mrb[0].mxu0
        %v507 = vadd.f32 %v437, %v506
        %v508 = vpop.f32.mrb[0].mxu0
        %v509 = vpop.f32.mrb[0].mxu0
        %v510 = vadd.f32 %v437, %v509
        %v511 = vpop.f32.mrb[0].mxu0
        %512 = vmatprep.mubr.bf16.mxu0 0
        %513 = vmatmul.mubr.bf16.gmra.mrb[0].mxu0 %v459
        %v514 = vpop.f32.mrb[0].mxu0
        %v515 = vadd.f32 %v437, %v514
        %v516 = vpop.f32.mrb[0].mxu0
        %v517 = vpop.f32.mrb[0].mxu0
        %v518 = vadd.f32 %v437, %v517
        %v519 = vpop.f32.mrb[0].mxu0
        %520 = vmatprep.mubr.bf16.mxu0 0
        %521 = vmatmul.mubr.bf16.gmra.mrb[0].mxu0 %v462
        %v522 = vpop.f32.mrb[0].mxu0
        %v523 = vadd.f32 %v437, %v522
        %v524 = vpop.f32.mrb[0].mxu0
        %v525 = vpop.f32.mrb[0].mxu0
        %v526 = vadd.f32 %v437, %v525
        %v527 = vpop.f32.mrb[0].mxu0
        %528 = vdwg.mxu0
        %529 = vadd.xlane.f32.xlu0 %v499
        %v530 = vpop.xlane.xlu0 %529
        %531 = vadd.xlane.f32.xlu0 %v502
        %v532 = vpop.xlane.xlu0 %531
        %533 = vadd.xlane.f32.xlu0 %v507
        %v534 = vpop.xlane.xlu0 %533
        %535 = vadd.xlane.f32.xlu0 %v510
        %v536 = vpop.xlane.xlu0 %535
        %537 = vadd.xlane.f32.xlu0 %v515
        %v538 = vpop.xlane.xlu0 %537
        %539 = vadd.xlane.f32.xlu0 %v518
        %v540 = vpop.xlane.xlu0 %539
        %541 = vadd.xlane.f32.xlu0 %v523
        %v542 = vpop.xlane.xlu0 %541
        %543 = vadd.xlane.f32.xlu0 %v526
        %v544 = vpop.xlane.xlu0 %543
        %v545 = vrcp.pop 128.0
        %v546 = vmul.f32 %v530, %v545
        %v547 = vmul.f32 %v532, %v545
        %v548 = vmul.f32 %v534, %v545
        %v549 = vmul.f32 %v536, %v545
        %v550 = vmul.f32 %v538, %v545
        %v551 = vmul.f32 %v540, %v545
        %v552 = vmul.f32 %v542, %v545
        %v553 = vmul.f32 %v544, %v545
        %v554 = vsub.f32 %v499, %v546
        %v555 = vsub.f32 %v502, %v547
        %v556 = vsub.f32 %v507, %v548
        %v557 = vsub.f32 %v510, %v549
        %v558 = vsub.f32 %v515, %v550
        %v559 = vsub.f32 %v518, %v551
        %v560 = vsub.f32 %v523, %v552
        %v561 = vsub.f32 %v526, %v553
        %v562 = vmul.f32 %v554, %v554
        %v563 = vmul.f32 %v555, %v555
        %v564 = vmul.f32 %v556, %v556
        %v565 = vmul.f32 %v557, %v557
        %v566 = vmul.f32 %v558, %v558
        %v567 = vmul.f32 %v559, %v559
        %v568 = vmul.f32 %v560, %v560
        %v569 = vmul.f32 %v561, %v561
        %570 = vadd.xlane.f32.xlu0 %v562
        %v571 = vpop.xlane.xlu0 %570
        %572 = vadd.xlane.f32.xlu0 %v563
        %v573 = vpop.xlane.xlu0 %572
        %574 = vadd.xlane.f32.xlu0 %v564
        %v575 = vpop.xlane.xlu0 %574
        %576 = vadd.xlane.f32.xlu0 %v565
        %v577 = vpop.xlane.xlu0 %576
        %578 = vadd.xlane.f32.xlu0 %v566
        %v579 = vpop.xlane.xlu0 %578
        %580 = vadd.xlane.f32.xlu0 %v567
        %v581 = vpop.xlane.xlu0 %580
        %582 = vadd.xlane.f32.xlu0 %v568
        %v583 = vpop.xlane.xlu0 %582
        %584 = vadd.xlane.f32.xlu0 %v569
        %v585 = vpop.xlane.xlu0 %584
        %v586 = vmul.f32 %v571, %v545
        %v587 = vmul.f32 %v573, %v545
        %v588 = vmul.f32 %v575, %v545
        %v589 = vmul.f32 %v577, %v545
        %v590 = vmul.f32 %v579, %v545
        %v591 = vmul.f32 %v581, %v545
        %v592 = vmul.f32 %v583, %v545
        %v593 = vmul.f32 %v585, %v545
        %v594 = vadd.f32 %v586, 1e-05
        %v595 = vadd.f32 %v587, 1e-05
        %v596 = vadd.f32 %v588, 1e-05
        %v597 = vadd.f32 %v589, 1e-05
        %v598 = vadd.f32 %v590, 1e-05
        %v599 = vadd.f32 %v591, 1e-05
        %v600 = vadd.f32 %v592, 1e-05
        %v601 = vadd.f32 %v593, 1e-05
        %v602 = vrsqrt.pop %v594
        %v603 = vrsqrt.pop %v595
        %v604 = vrsqrt.pop %v596
        %v605 = vrsqrt.pop %v597
        %v606 = vrsqrt.pop %v598
        %v607 = vrsqrt.pop %v599
        %v608 = vrsqrt.pop %v600
        %v609 = vrsqrt.pop %v601
        %v610 = vmul.f32 %v554, %v602
        %v611 = vmul.f32 %v555, %v603
        %v612 = vmul.f32 %v556, %v604
        %v613 = vmul.f32 %v557, %v605
        %v614 = vmul.f32 %v558, %v606
        %v615 = vmul.f32 %v559, %v607
        %v616 = vmul.f32 %v560, %v608
        %v617 = vmul.f32 %v561, %v609
        %v618 = vld [vmem:[%s3] sm:$0x1]
        %v620 = vlaneseq
        %v621 = vshrl.u32 %v620, 7
        %v622 = vsub.s32 0, %v621
        %v623 = vrot.slane %v618, %v622
        %v625 = vmul.f32 %v610, %v623
        %v626 = vmul.f32 %v611, %v623
        %v627 = vmul.f32 %v612, %v623
        %v628 = vmul.f32 %v613, %v623
        %v629 = vmul.f32 %v614, %v623
        %v630 = vmul.f32 %v615, %v623
        %v631 = vmul.f32 %v616, %v623
        %v632 = vmul.f32 %v617, %v623
        %v633 = vld [vmem:[%s4] sm:$0x1]
        %v635 = vlaneseq
        %v636 = vshrl.u32 %v635, 7
        %v637 = vsub.s32 0, %v636
        %v638 = vrot.slane %v633, %v637
        %v640 = vadd.f32 %v625, %v638
        %v641 = vadd.f32 %v626, %v638
        %v642 = vadd.f32 %v627, %v638
        %v643 = vadd.f32 %v628, %v638
        %v644 = vadd.f32 %v629, %v638
        %v645 = vadd.f32 %v630, %v638
        %v646 = vadd.f32 %v631, %v638
        %v647 = vadd.f32 %v632, %v638
        %v648 = vmul.f32 %v640, %v640
        %v649 = vmul.f32 %v641, %v641
        %v650 = vmul.f32 %v642, %v642
        %v651 = vmul.f32 %v643, %v643
        %v652 = vmul.f32 %v644, %v644
        %v653 = vmul.f32 %v645, %v645
        %v654 = vmul.f32 %v646, %v646
        %v655 = vmul.f32 %v647, %v647
        %v656 = vmul.f32 %v640, %v648
        %v657 = vmul.f32 %v641, %v649
        %v658 = vmul.f32 %v642, %v650
        %v659 = vmul.f32 %v643, %v651
        %v660 = vmul.f32 %v644, %v652
        %v661 = vmul.f32 %v645, %v653
        %v662 = vmul.f32 %v646, %v654
        %v663 = vmul.f32 %v647, %v655
        %v664 = vmul.f32 %v656, 0.044715
        %v665 = vmul.f32 %v657, 0.044715
        %v666 = vmul.f32 %v658, 0.044715
        %v667 = vmul.f32 %v659, 0.044715
        %v668 = vmul.f32 %v660, 0.044715
        %v669 = vmul.f32 %v661, 0.044715
        %v670 = vmul.f32 %v662, 0.044715
        %v671 = vmul.f32 %v663, 0.044715
        %v672 = vadd.f32 %v640, %v664
        %v673 = vadd.f32 %v641, %v665
        %v674 = vadd.f32 %v642, %v666
        %v675 = vadd.f32 %v643, %v667
        %v676 = vadd.f32 %v644, %v668
        %v677 = vadd.f32 %v645, %v669
        %v678 = vadd.f32 %v646, %v670
        %v679 = vadd.f32 %v647, %v671
        %v680 = vmul.f32 %v672, 0.7978846
        %v681 = vmul.f32 %v673, 0.7978846
        %v682 = vmul.f32 %v674, 0.7978846
        %v683 = vmul.f32 %v675, 0.7978846
        %v684 = vmul.f32 %v676, 0.7978846
        %v685 = vmul.f32 %v677, 0.7978846
        %v686 = vmul.f32 %v678, 0.7978846
        %v687 = vmul.f32 %v679, 0.7978846
        %v688 = vtanh.pop %v680
        %v689 = vtanh.pop %v681
        %v690 = vtanh.pop %v682
        %v691 = vtanh.pop %v683
        %v692 = vtanh.pop %v684
        %v693 = vtanh.pop %v685
        %v694 = vtanh.pop %v686
        %v695 = vtanh.pop %v687
        %v696 = vadd.f32 %v688, 1.0
        %v697 = vadd.f32 %v689, 1.0
        %v698 = vadd.f32 %v690, 1.0
        %v699 = vadd.f32 %v691, 1.0
        %v700 = vadd.f32 %v692, 1.0
        %v701 = vadd.f32 %v693, 1.0
        %v702 = vadd.f32 %v694, 1.0
        %v703 = vadd.f32 %v695, 1.0
        %v704 = vmul.f32 %v696, 0.5
        %v705 = vmul.f32 %v697, 0.5
        %v706 = vmul.f32 %v698, 0.5
        %v707 = vmul.f32 %v699, 0.5
        %v708 = vmul.f32 %v700, 0.5
        %v709 = vmul.f32 %v701, 0.5
        %v710 = vmul.f32 %v702, 0.5
        %v711 = vmul.f32 %v703, 0.5
        %v712 = vmul.f32 %v640, %v704
        %v713 = vmul.f32 %v641, %v705
        %v714 = vmul.f32 %v642, %v706
        %v715 = vmul.f32 %v643, %v707
        %v716 = vmul.f32 %v644, %v708
        %v717 = vmul.f32 %v645, %v709
        %v718 = vmul.f32 %v646, %v710
        %v719 = vmul.f32 %v647, %v711
        %v720 = vpack.c.bf16 %v713, %v712
        %v721 = vpack.c.bf16 %v715, %v714
        %v722 = vpack.c.bf16 %v717, %v716
        %v723 = vpack.c.bf16 %v719, %v718
        %v724 = vld [vmem:[%s5] sm:$0xf]
        %v725 = vld [vmem:[%s5 + $0x4] sm:$0xf]
        %v726 = vld [vmem:[%s5 + $0x8] sm:$0xf]
        %v727 = vld [vmem:[%s5 + $0xc] sm:$0xf]
        %v728 = vld [vmem:[%s5 + $0x10] sm:$0xf]
        %v729 = vld [vmem:[%s5 + $0x14] sm:$0xf]
        %v730 = vld [vmem:[%s5 + $0x18] sm:$0xf]
        %v731 = vld [vmem:[%s5 + $0x1c] sm:$0xf]
        %v732 = vld [vmem:[%s5 + $0x20] sm:$0xf]
        %v733 = vld [vmem:[%s5 + $0x24] sm:$0xf]
        %v734 = vld [vmem:[%s5 + $0x28] sm:$0xf]
        %v735 = vld [vmem:[%s5 + $0x2c] sm:$0xf]
        %v736 = vld [vmem:[%s5 + $0x30] sm:$0xf]
        %v737 = vld [vmem:[%s5 + $0x34] sm:$0xf]
        %v738 = vld [vmem:[%s5 + $0x38] sm:$0xf]
        %v739 = vld [vmem:[%s5 + $0x3c] sm:$0xf]
        %v740 = vld [vmem:[%s6] sm:$0x1]
        %v742 = vlaneseq
        %v743 = vshrl.u32 %v742, 7
        %v744 = vsub.s32 0, %v743
        %v745 = vrot.slane %v740, %v744
        %v763 = vunpack.c.l.b16 %v724
        %v764 = vunpack.c.l.b16 %v725
        %v765 = vunpack.c.l.b16 %v726
        %v766 = vunpack.c.l.b16 %v727
        %v767 = vunpack.c.l.b16 %v728
        %v768 = vunpack.c.l.b16 %v729
        %v769 = vunpack.c.l.b16 %v730
        %v770 = vunpack.c.l.b16 %v731
        %v771 = vunpack.c.l.b16 %v732
        %v772 = vunpack.c.l.b16 %v733
        %v773 = vunpack.c.l.b16 %v734
        %v774 = vunpack.c.l.b16 %v735
        %v775 = vunpack.c.l.b16 %v736
        %v776 = vunpack.c.l.b16 %v737
        %v777 = vunpack.c.l.b16 %v738
        %v778 = vunpack.c.l.b16 %v739
        %v779 = vpack.c.b16 %v764, %v763
        %v780 = vpack.c.b16 %v766, %v765
        %v781 = vpack.c.b16 %v768, %v767
        %v782 = vpack.c.b16 %v770, %v769
        %v783 = vpack.c.b16 %v772, %v771
        %v784 = vpack.c.b16 %v774, %v773
        %v785 = vpack.c.b16 %v776, %v775
        %v786 = vpack.c.b16 %v778, %v777
        %795 = vmatprep.subr.bf16.mxu0 0
        %796 = vmatpush1.bf16.msra.mxu0 %v779
        %797 = vmatprep.subr.bf16.mxu0 0
        %798 = vmatpush1.bf16.msra.mxu0 %v780
        %799 = vmatprep.subr.bf16.mxu0 0
        %800 = vmatpush1.bf16.msra.mxu0 %v781
        %801 = vmatprep.subr.bf16.mxu0 0
        %802 = vmatpush1.bf16.msra.mxu0 %v782
        %803 = vmatprep.subr.bf16.mxu0 0
        %804 = vmatpush1.bf16.msra.mxu0 %v783
        %805 = vmatprep.subr.bf16.mxu0 0
        %806 = vmatpush1.bf16.msra.mxu0 %v784
        %807 = vmatprep.subr.bf16.mxu0 0
        %808 = vmatpush1.bf16.msra.mxu0 %v785
        %809 = vmatprep.subr.bf16.mxu0 0
        %810 = vmatpush1.bf16.msra.mxu0 %v786
        %811 = vmatprep.subr.bf16.mxu0 0
        %812 = vmatpush1.bf16.msra.mxu0 0
        %813 = vmatprep.subr.bf16.mxu0 0
        %814 = vmatpush1.bf16.msra.mxu0 0
        %815 = vmatprep.subr.bf16.mxu0 0
        %816 = vmatpush1.bf16.msra.mxu0 0
        %817 = vmatprep.subr.bf16.mxu0 0
        %818 = vmatpush1.bf16.msra.mxu0 0
        %819 = vmatprep.subr.bf16.mxu0 0
        %820 = vmatpush1.bf16.msra.mxu0 0
        %821 = vmatprep.subr.bf16.mxu0 0
        %822 = vmatpush1.bf16.msra.mxu0 0
        %823 = vmatprep.subr.bf16.mxu0 0
        %824 = vmatpush1.bf16.msra.mxu0 0
        %825 = vmatprep.subr.bf16.mxu0 0
        %826 = vmatpush1.bf16.msra.mxu0 0
        %827 = vmatprep.mubr.bf16.mxu0 0
        %828 = vmatmul.mubr.bf16.gmra.mrb[0].mxu0 %v720
        %v829 = vpop.f32.mrb[0].mxu0
        %v830 = vadd.f32 %v745, %v829
        %v831 = vpop.f32.mrb[0].mxu0
        %v832 = vpop.f32.mrb[0].mxu0
        %v833 = vadd.f32 %v745, %v832
        %v834 = vpop.f32.mrb[0].mxu0
        %835 = vmatprep.mubr.bf16.mxu0 0
        %836 = vmatmul.mubr.bf16.gmra.mrb[0].mxu0 %v721
        %v837 = vpop.f32.mrb[0].mxu0
        %v838 = vadd.f32 %v745, %v837
        %v839 = vpop.f32.mrb[0].mxu0
        %v840 = vpop.f32.mrb[0].mxu0
        %v841 = vadd.f32 %v745, %v840
        %v842 = vpop.f32.mrb[0].mxu0
        %843 = vmatprep.mubr.bf16.mxu0 0
        %844 = vmatmul.mubr.bf16.gmra.mrb[0].mxu0 %v722
        %v845 = vpop.f32.mrb[0].mxu0
        %v846 = vadd.f32 %v745, %v845
        %v847 = vpop.f32.mrb[0].mxu0
        %v848 = vpop.f32.mrb[0].mxu0
        %v849 = vadd.f32 %v745, %v848
        %v850 = vpop.f32.mrb[0].mxu0
        %851 = vmatprep.mubr.bf16.mxu0 0
        %852 = vmatmul.mubr.bf16.gmra.mrb[0].mxu0 %v723
        %v853 = vpop.f32.mrb[0].mxu0
        %v854 = vadd.f32 %v745, %v853
        %v855 = vpop.f32.mrb[0].mxu0
        %v856 = vpop.f32.mrb[0].mxu0
        %v857 = vadd.f32 %v745, %v856
        %v858 = vpop.f32.mrb[0].mxu0
        %859 = vdwg.mxu0
        %860 = vadd.xlane.f32.xlu0 %v830
        %v861 = vpop.xlane.xlu0 %860
        %862 = vadd.xlane.f32.xlu0 %v833
        %v863 = vpop.xlane.xlu0 %862
        %864 = vadd.xlane.f32.xlu0 %v838
        %v865 = vpop.xlane.xlu0 %864
        %866 = vadd.xlane.f32.xlu0 %v841
        %v867 = vpop.xlane.xlu0 %866
        %868 = vadd.xlane.f32.xlu0 %v846
        %v869 = vpop.xlane.xlu0 %868
        %870 = vadd.xlane.f32.xlu0 %v849
        %v871 = vpop.xlane.xlu0 %870
        %872 = vadd.xlane.f32.xlu0 %v854
        %v873 = vpop.xlane.xlu0 %872
        %874 = vadd.xlane.f32.xlu0 %v857
        %v875 = vpop.xlane.xlu0 %874
        %v876 = vmul.f32 %v861, %v545
        %v877 = vmul.f32 %v863, %v545
        %v878 = vmul.f32 %v865, %v545
        %v879 = vmul.f32 %v867, %v545
        %v880 = vmul.f32 %v869, %v545
        %v881 = vmul.f32 %v871, %v545
        %v882 = vmul.f32 %v873, %v545
        %v883 = vmul.f32 %v875, %v545
        %v884 = vsub.f32 %v830, %v876
        %v885 = vsub.f32 %v833, %v877
        %v886 = vsub.f32 %v838, %v878
        %v887 = vsub.f32 %v841, %v879
        %v888 = vsub.f32 %v846, %v880
        %v889 = vsub.f32 %v849, %v881
        %v890 = vsub.f32 %v854, %v882
        %v891 = vsub.f32 %v857, %v883
        %v892 = vmul.f32 %v884, %v884
        %v893 = vmul.f32 %v885, %v885
        %v894 = vmul.f32 %v886, %v886
        %v895 = vmul.f32 %v887, %v887
        %v896 = vmul.f32 %v888, %v888
        %v897 = vmul.f32 %v889, %v889
        %v898 = vmul.f32 %v890, %v890
        %v899 = vmul.f32 %v891, %v891
        %900 = vadd.xlane.f32.xlu0 %v892
        %v901 = vpop.xlane.xlu0 %900
        %902 = vadd.xlane.f32.xlu0 %v893
        %v903 = vpop.xlane.xlu0 %902
        %904 = vadd.xlane.f32.xlu0 %v894
        %v905 = vpop.xlane.xlu0 %904
        %906 = vadd.xlane.f32.xlu0 %v895
        %v907 = vpop.xlane.xlu0 %906
        %908 = vadd.xlane.f32.xlu0 %v896
        %v909 = vpop.xlane.xlu0 %908
        %910 = vadd.xlane.f32.xlu0 %v897
        %v911 = vpop.xlane.xlu0 %910
        %912 = vadd.xlane.f32.xlu0 %v898
        %v913 = vpop.xlane.xlu0 %912
        %914 = vadd.xlane.f32.xlu0 %v899
        %v915 = vpop.xlane.xlu0 %914
        %v916 = vmul.f32 %v901, %v545
        %v917 = vmul.f32 %v903, %v545
        %v918 = vmul.f32 %v905, %v545
        %v919 = vmul.f32 %v907, %v545
        %v920 = vmul.f32 %v909, %v545
        %v921 = vmul.f32 %v911, %v545
        %v922 = vmul.f32 %v913, %v545
        %v923 = vmul.f32 %v915, %v545
        %v924 = vadd.f32 %v916, 1e-05
        %v925 = vadd.f32 %v917, 1e-05
        %v926 = vadd.f32 %v918, 1e-05
        %v927 = vadd.f32 %v919, 1e-05
        %v928 = vadd.f32 %v920, 1e-05
        %v929 = vadd.f32 %v921, 1e-05
        %v930 = vadd.f32 %v922, 1e-05
        %v931 = vadd.f32 %v923, 1e-05
        %v932 = vrsqrt.pop %v924
        %v933 = vrsqrt.pop %v925
        %v934 = vrsqrt.pop %v926
        %v935 = vrsqrt.pop %v927
        %v936 = vrsqrt.pop %v928
        %v937 = vrsqrt.pop %v929
        %v938 = vrsqrt.pop %v930
        %v939 = vrsqrt.pop %v931
        %v940 = vmul.f32 %v884, %v932
        %v941 = vmul.f32 %v885, %v933
        %v942 = vmul.f32 %v886, %v934
        %v943 = vmul.f32 %v887, %v935
        %v944 = vmul.f32 %v888, %v936
        %v945 = vmul.f32 %v889, %v937
        %v946 = vmul.f32 %v890, %v938
        %v947 = vmul.f32 %v891, %v939
        %v948 = vld [vmem:[%s7] sm:$0x1]
        %v950 = vlaneseq
        %v951 = vshrl.u32 %v950, 7
        %v952 = vsub.s32 0, %v951
        %v953 = vrot.slane %v948, %v952
        %v955 = vmul.f32 %v940, %v953
        %v956 = vmul.f32 %v941, %v953
        %v957 = vmul.f32 %v942, %v953
        %v958 = vmul.f32 %v943, %v953
        %v959 = vmul.f32 %v944, %v953
        %v960 = vmul.f32 %v945, %v953
        %v961 = vmul.f32 %v946, %v953
        %v962 = vmul.f32 %v947, %v953
        %v963 = vld [vmem:[%s8] sm:$0x1]
        %v965 = vlaneseq
        %v966 = vshrl.u32 %v965, 7
        %v967 = vsub.s32 0, %v966
        %v968 = vrot.slane %v963, %v967
        %v970 = vadd.f32 %v955, %v968
        %v971 = vadd.f32 %v956, %v968
        %v972 = vadd.f32 %v957, %v968
        %v973 = vadd.f32 %v958, %v968
        %v974 = vadd.f32 %v959, %v968
        %v975 = vadd.f32 %v960, %v968
        %v976 = vadd.f32 %v961, %v968
        %v977 = vadd.f32 %v962, %v968
        %v978 = vmul.f32 %v970, %v970
        %v979 = vmul.f32 %v971, %v971
        %v980 = vmul.f32 %v972, %v972
        %v981 = vmul.f32 %v973, %v973
        %v982 = vmul.f32 %v974, %v974
        %v983 = vmul.f32 %v975, %v975
        %v984 = vmul.f32 %v976, %v976
        %v985 = vmul.f32 %v977, %v977
        %v986 = vmul.f32 %v970, %v978
        %v987 = vmul.f32 %v971, %v979
        %v988 = vmul.f32 %v972, %v980
        %v989 = vmul.f32 %v973, %v981
        %v990 = vmul.f32 %v974, %v982
        %v991 = vmul.f32 %v975, %v983
        %v992 = vmul.f32 %v976, %v984
        %v993 = vmul.f32 %v977, %v985
        %v994 = vmul.f32 %v986, 0.044715
        %v995 = vmul.f32 %v987, 0.044715
        %v996 = vmul.f32 %v988, 0.044715
        %v997 = vmul.f32 %v989, 0.044715
        %v998 = vmul.f32 %v990, 0.044715
        %v999 = vmul.f32 %v991, 0.044715
        %v1000 = vmul.f32 %v992, 0.044715
        %v1001 = vmul.f32 %v993, 0.044715
        %v1002 = vadd.f32 %v970, %v994
        %v1003 = vadd.f32 %v971, %v995
        %v1004 = vadd.f32 %v972, %v996
        %v1005 = vadd.f32 %v973, %v997
        %v1006 = vadd.f32 %v974, %v998
        %v1007 = vadd.f32 %v975, %v999
        %v1008 = vadd.f32 %v976, %v1000
        %v1009 = vadd.f32 %v977, %v1001
        %v1010 = vmul.f32 %v1002, 0.7978846
        %v1011 = vmul.f32 %v1003, 0.7978846
        %v1012 = vmul.f32 %v1004, 0.7978846
        %v1013 = vmul.f32 %v1005, 0.7978846
        %v1014 = vmul.f32 %v1006, 0.7978846
        %v1015 = vmul.f32 %v1007, 0.7978846
        %v1016 = vmul.f32 %v1008, 0.7978846
        %v1017 = vmul.f32 %v1009, 0.7978846
        %v1018 = vtanh.pop %v1010
        %v1019 = vtanh.pop %v1011
        %v1020 = vtanh.pop %v1012
        %v1021 = vtanh.pop %v1013
        %v1022 = vtanh.pop %v1014
        %v1023 = vtanh.pop %v1015
        %v1024 = vtanh.pop %v1016
        %v1025 = vtanh.pop %v1017
        %v1026 = vadd.f32 %v1018, 1.0
        %v1027 = vadd.f32 %v1019, 1.0
        %v1028 = vadd.f32 %v1020, 1.0
        %v1029 = vadd.f32 %v1021, 1.0
        %v1030 = vadd.f32 %v1022, 1.0
        %v1031 = vadd.f32 %v1023, 1.0
        %v1032 = vadd.f32 %v1024, 1.0
        %v1033 = vadd.f32 %v1025, 1.0
        %v1034 = vmul.f32 %v1026, 0.5
        %v1035 = vmul.f32 %v1027, 0.5
        %v1036 = vmul.f32 %v1028, 0.5
        %v1037 = vmul.f32 %v1029, 0.5
        %v1038 = vmul.f32 %v1030, 0.5
        %v1039 = vmul.f32 %v1031, 0.5
        %v1040 = vmul.f32 %v1032, 0.5
        %v1041 = vmul.f32 %v1033, 0.5
        %v1042 = vmul.f32 %v970, %v1034
        %v1043 = vmul.f32 %v971, %v1035
        %v1044 = vmul.f32 %v972, %v1036
        %v1045 = vmul.f32 %v973, %v1037
        %v1046 = vmul.f32 %v974, %v1038
        %v1047 = vmul.f32 %v975, %v1039
        %v1048 = vmul.f32 %v976, %v1040
        %v1049 = vmul.f32 %v977, %v1041
        %v1050 = vld [vmem:[%s9] sm:$0xf]
        %v1051 = vld [vmem:[%s9 + $0x4] sm:$0xf]
        %v1052 = vpack.c.bf16 %v1043, %v1042
        %v1053 = vpack.c.bf16 %v1045, %v1044
        %v1054 = vpack.c.bf16 %v1047, %v1046
        %v1055 = vpack.c.bf16 %v1049, %v1048
        %v1056 = vld [vmem:[%s10] sm:$0xff]
        %v1057 = vld [vmem:[%s10 + $0x8] sm:$0xff]
        %1059 = vset.pattern.permute.xlu0 0
        %1060 = vperm.xlu0 %1059, %v1056
        %v1061 = vpop.permute.xlu0 %1060
        %1064 = vset.pattern.permute.xlu0 0
        %1065 = vperm.xlu0 %1064, %v1057
        %v1066 = vpop.permute.xlu0 %1065
        %v1070 = vunpack.c.l.b16 %v1050
        %v1071 = vunpack.c.l.b16 %v1051
        %v1072 = vpack.c.b16 %v1071, %v1070
        %1074 = vmatprep.subr.bf16.mxu0 0
        %1075 = vmatpush1.bf16.xpose.msra.mxu0 %v1052
        %1076 = vmatprep.subr.bf16.mxu0 0
        %1077 = vmatpush1.bf16.xpose.msra.mxu0 %v1053
        %1078 = vmatprep.subr.bf16.mxu0 0
        %1079 = vmatpush1.bf16.xpose.msra.mxu0 %v1054
        %1080 = vmatprep.subr.bf16.mxu0 0
        %1081 = vmatpush1.bf16.xpose.msra.mxu0 %v1055
        %1082 = vmatprep.subr.bf16.mxu0 0
        %1083 = vmatpush1.bf16.xpose.msra.mxu0 0
        %1084 = vmatprep.subr.bf16.mxu0 0
        %1085 = vmatpush1.bf16.xpose.msra.mxu0 0
        %1086 = vmatprep.subr.bf16.mxu0 0
        %1087 = vmatpush1.bf16.xpose.msra.mxu0 0
        %1088 = vmatprep.subr.bf16.mxu0 0
        %1089 = vmatpush1.bf16.xpose.msra.mxu0 0
        %1090 = vmatprep.subr.bf16.mxu0 0
        %1091 = vmatpush1.bf16.xpose.msra.mxu0 0
        %1092 = vmatprep.subr.bf16.mxu0 0
        %1093 = vmatpush1.bf16.xpose.msra.mxu0 0
        %1094 = vmatprep.subr.bf16.mxu0 0
        %1095 = vmatpush1.bf16.xpose.msra.mxu0 0
        %1096 = vmatprep.subr.bf16.mxu0 0
        %1097 = vmatpush1.bf16.xpose.msra.mxu0 0
        %1098 = vmatprep.subr.bf16.mxu0 0
        %1099 = vmatpush1.bf16.xpose.msra.mxu0 0
        %1100 = vmatprep.subr.bf16.mxu0 0
        %1101 = vmatpush1.bf16.xpose.msra.mxu0 0
        %1102 = vmatprep.subr.bf16.mxu0 0
        %1103 = vmatpush1.bf16.xpose.msra.mxu0 0
        %1104 = vmatprep.subr.bf16.mxu0 0
        %1105 = vmatpush1.bf16.xpose.msra.mxu0 0
        %1106 = vmatprep.mubr.bf16.mxu0 0
        %1107 = vmatmul.mubr.bf16.gmra.mrb[0].mxu0 %v1072
        %v1108 = vpop.f32.mrb[0].mxu0
        %v1109 = vadd.f32 %v1061, %v1108
        %v1110 = vpop.f32.mrb[0].mxu0
        %v1111 = vpop.f32.mrb[0].mxu0
        %v1112 = vadd.f32 %v1066, %v1111
        %v1113 = vpop.f32.mrb[0].mxu0
        %1114 = vdwg.mxu0
        %vm1115 = vcmask 523264
        %1116 = vst.msk [vmem:[%s404] sm:$0xff] %vm1115, %v1109
        %1117 = vst.msk [vmem:[%s404 + $0x8] sm:$0xff] %vm1115, %v1112
        %s1118 = sand.u32 %s285, 1
        %s1119 = scalar_lea.sflag [#allocation3], %s1118
        %s1120 = sand.u32 %s285, 1
        %s1121 = smul.addr %s1120, 16
        %s1122 = scalar_lea.vmem [#allocation2], %s1121
        // Predicated region
        $region65: #{tpu_custom_call.1} parent=63 // pred_check
          %p1123 = pneg %p295
        $region66: #{tpu_custom_call.1} parent=63 // pred_check_branch
          %1125 = sbr.rel (%p1123) target = $region68
        $region67: #{tpu_custom_call.1} parent=63 // pred_region
          %s1127 = ssub.s32 256, 256
          %1128 = vsyncadd %s1119, %s1127
          %s1129 = smul.addr %s29, 2
          %s1130 = sadd.s32 %s30, %s1129
          %s1131 = smul.addr %s1130, 128
          %s1132 = scalar_lea.hbm %s11, %s1131
          %s1133 = sshll.u32 %s1122, 4
          %s1134 = int_to_ptr.vmem [resolvable:$true] %s1133
          %1139 = dma.vmem_to_hbm [thread:$0]  %s1134, 256, %s1132, %s1119, 128, 128, 8
        $region68: #{tpu_custom_call.1} parent=63 // pred_fallthru
          _
      $region64: #{tpu_custom_call.1} parent=5 // pred_fallthru
        _
      %p1140 = scmp.le.s32.totalorder 2, %s20
      // Predicated region
      $region69: #{tpu_custom_call.1} parent=5 // pred_check
        %p1141 = pneg %p1140
      $region70: #{tpu_custom_call.1} parent=5 // pred_check_branch
        %1143 = sbr.rel (%p1141) target = $region72
      $region71: #{tpu_custom_call.1} parent=5 // pred_region
        %s1144 = ssub.s32 %s20, 2
        // Predicated region
        $region73: #{tpu_custom_call.1} parent=71 // pred_check
          %p1145 = pneg %p301
        $region74: #{tpu_custom_call.1} parent=71 // pred_check_branch
          %1147 = sbr.rel (%p1145) target = $region76
        $region75: #{tpu_custom_call.1} parent=71 // pred_region
          %s1148 = sand.u32 %s286, 1
          %s1149 = scalar_lea.sflag [#allocation3], %s1148
          %s1150 = sand.u32 %s286, 1
          %s1151 = smul.addr %s1150, 16
          %s1152 = scalar_lea.vmem [#allocation2], %s1151
          %1153 = dma.done %s1149, 256
        $region76: #{tpu_custom_call.1} parent=71 // pred_fallthru
          _
      $region72: #{tpu_custom_call.1} parent=5 // pred_fallthru
        _
    $region6: #{tpu_custom_call.1} parent=1 // loop_footer
      %s24 = sadd.s32 1, %s20
    $region7: #{tpu_custom_call.1} parent=1 // loop_footer_branch
      %19 = sbr.rel target = $region3
    $region8: #{tpu_custom_call.1} parent=1 // loop_exit
      _
    %1154 = vsyncpa [#allocation3], 1
    %s1155 = scalar_lea.sflag [#allocation3], 1
    %1156 = vsyncpa %s1155, 1

</llo_original>
